<compile_context>
chip_gen: v6e
topology: v6e:2x2x1
jax: 0.10.0
libtpu: 0.0.40
codegen_flags: <defaults>
</compile_context>

<pallas_src>
import jax
import jax.numpy as jnp
from jax.experimental import pallas as pl
from jax.experimental.pallas import tpu as pltpu

BN_EPS = 1e-5
HEAD_LANES = 128          # lane-dense padded width of the fused head output


# ------------------------------ fused kernel ------------------------------- #

def _make_stem_kernel(H, W, total_rows):
    """conv(im2col) -> BN(batch stats) -> ReLU -> maxpool(3,2,1) -> avgpool
       -> fused task heads, over a (phase, batch-tile) grid."""
    Hh, Wh = H // 2, W // 2
    inv_cnt = 1.0 / float(total_rows)     # 1 / (N*H*W) for the BN batch stats
    inv_pool = 1.0 / float(Hh * Wh)       # AdaptiveAvgPool2d((1,1))

    def kernel(patch_ref, wc_ref, gamma_ref, beta_ref, fcw_ref, fcb_ref,
               out_ref, sum_ref, sq_ref):
        phase = pl.program_id(0)          # 0: accumulate BN stats, 1: apply
        btile = pl.program_id(1)          # batch tile index
        BT, HW, Kp = patch_ref.shape
        Cout = wc_ref.shape[1]

        # conv1: 3x3, stride 1, pad 1, no bias — a single im2col MXU dot
        # (bf16 operands, f32 accumulation, K padded to 32).
        acc = jnp.dot(patch_ref[...].reshape(BT * HW, Kp), wc_ref[...],
                      preferred_element_type=jnp.float32)       # (BT*HW, Cout)

        @pl.when(jnp.logical_and(phase == 0, btile == 0))
        def _init_stats():
            sum_ref[...] = jnp.zeros_like(sum_ref)
            sq_ref[...] = jnp.zeros_like(sq_ref)

        @pl.when(phase == 0)
        def _accumulate_stats():
            # f32 sum / sum-of-squares accumulators.  Conv outputs are O(1),
            # so the E[x^2]-E[x]^2 form is numerically safe in f32 here.
            sum_ref[...] += jnp.sum(acc, axis=0, keepdims=True)
            sq_ref[...] += jnp.sum(acc * acc, axis=0, keepdims=True)

        @pl.when(phase == 1)
        def _apply():
            # bn1 (training-mode batch statistics, biased variance) + ReLU.
            mean = sum_ref[...] * inv_cnt                       # (1, Cout)
            var = jnp.maximum(sq_ref[...] * inv_cnt - mean * mean, 0.0)
            scale = gamma_ref[...] * jax.lax.rsqrt(var + BN_EPS)
            shift = beta_ref[...] - mean * scale
            z = jnp.maximum(acc * scale + shift, 0.0)
            z = z.reshape(BT, Hh, 2, W, Cout)

            # MaxPool2d(3, stride 2, pad 1): output center i covers rows
            # 2i-1, 2i, 2i+1.  Zero padding only touches the top/left window
            # and values are >= 0 post-ReLU, so dropping the pad is exact.
            even_r, odd_r = z[:, :, 0], z[:, :, 1]
            pmax = jnp.maximum(even_r, odd_r)                   # rows 2i,2i+1
            row_max = jnp.concatenate(
                [pmax[:, :1],
                 jnp.maximum(pmax[:, 1:], odd_r[:, :Hh - 1])], axis=1)

            r5 = row_max.reshape(BT, Hh, Wh, 2, Cout)
            even_c, odd_c = r5[:, :, :, 0, :], r5[:, :, :, 1, :]
            cmax = jnp.maximum(even_c, odd_c)                   # cols 2j,2j+1
            pooled = jnp.concatenate(
                [cmax[:, :, :1],
                 jnp.maximum(cmax[:, :, 1:], odd_c[:, :, :Wh - 1])], axis=2)

            # AdaptiveAvgPool2d((1,1)) + flatten.
            feat = jnp.sum(pooled, axis=(1, 2)) * inv_pool      # (BT, Cout)

            # All task Linear heads as one lane-dense (Cout, 128) matmul.
            logits = jnp.dot(feat.astype(jnp.bfloat16), fcw_ref[...],
                             preferred_element_type=jnp.float32) + fcb_ref[...]
            out_ref[...] = logits.reshape(out_ref.shape)

    return kernel


# --------------------------------- wrapper --------------------------------- #

def resnet_ltg_forward(x_nchw, params, task_class):
    """Forward pass of ResNet.forward for t=0, task_arch=None."""
    # TODO(synk): the t>0 softmax-gated conv1 mixture, the task_arch selection
    # branch, layer1..layer4 (dead code in forward) and the BatchNorm
    # running-stat updates are not implemented.
    x = jnp.transpose(x_nchw, (0, 2, 3, 1)).astype(jnp.bfloat16)  # NCHW->NHWC
    N, H, W, Cin = x.shape
    assert H % 2 == 0 and W % 2 == 0 and H >= 4 and W >= 4

    bt = 1                                  # images per grid step (batch tile)
    assert N % bt == 0
    nb = N // bt

    # ---- wrapper-side im2col (cheap at Cin=3): (N, H*W, 27 -> 32) bf16 ----- #
    xp = jnp.pad(x, ((0, 0), (1, 1), (1, 1), (0, 0)))
    patches = jnp.concatenate(
        [xp[:, dy:dy + H, dx:dx + W, :] for dy in range(3) for dx in range(3)],
        axis=-1)                                                # (N,H,W,9*Cin)
    K = 9 * Cin
    Kpad = ((K + 7) // 8) * 8
    patches = jnp.pad(patches, ((0, 0), (0, 0), (0, 0), (0, Kpad - K)))
    patches = patches.reshape(N, H * W, Kpad)

    # ---- weights ----------------------------------------------------------- #
    w_conv = params["conv1_w"].astype(jnp.bfloat16)             # (3,3,Cin,Cout)
    Cout = w_conv.shape[-1]
    wc = jnp.pad(w_conv.reshape(K, Cout), ((0, Kpad - K), (0, 0)))  # (Kpad,Cout)
    gamma = params["bn_gamma"].reshape(1, Cout).astype(jnp.float32)
    beta = params["bn_beta"].reshape(1, Cout).astype(jnp.float32)

    # Fuse all task heads and pad to a lane-dense (multiple of 128) width.
    fcw = jnp.concatenate([params["fc_w"][t] for (t, _c) in task_class], axis=1)
    fcb = jnp.concatenate([params["fc_b"][t] for (t, _c) in task_class], axis=1)
    Ctot = fcw.shape[1]
    Cpad = ((Ctot + HEAD_LANES - 1) // HEAD_LANES) * HEAD_LANES
    fcw = jnp.pad(fcw, ((0, 0), (0, Cpad - Ctot))).astype(jnp.bfloat16)
    fcb = jnp.pad(fcb, ((0, 0), (0, Cpad - Ctot))).astype(jnp.float32)

    kernel = _make_stem_kernel(H, W, N * H * W)

    out = pl.pallas_call(
        kernel,
        out_shape=jax.ShapeDtypeStruct((nb, bt, Cpad), jnp.float32),
        grid=(2, nb),                       # (phase, batch tile)
        in_specs=[
            pl.BlockSpec((bt, H * W, Kpad), lambda p, b: (b, 0, 0)),
            pl.BlockSpec((Kpad, Cout), lambda p, b: (0, 0)),
            pl.BlockSpec((1, Cout), lambda p, b: (0, 0)),
            pl.BlockSpec((1, Cout), lambda p, b: (0, 0)),
            pl.BlockSpec((Cout, Cpad), lambda p, b: (0, 0)),
            pl.BlockSpec((1, Cpad), lambda p, b: (0, 0)),
        ],
        # Phase 0 never writes the output; mapping every phase-0 step onto
        # block 0 keeps the buffer resident (no garbage write-backs) until the
        # matching phase-1 step fully overwrites it.
        out_specs=pl.BlockSpec((1, bt, Cpad), lambda p, b: (b * p, 0, 0)),
        scratch_shapes=[pltpu.VMEM((1, Cout), jnp.float32),   # BN sum
                        pltpu.VMEM((1, Cout), jnp.float32)],  # BN sum of squares
        compiler_params=pltpu.CompilerParams(
            # BN batch stats couple all batch tiles through the scratch, so
            # both grid axes must stay sequential.
            dimension_semantics=("arbitrary", "arbitrary"),
            vmem_limit_bytes=32 * 1024 * 1024),
    )(patches, wc, gamma, beta, fcw, fcb)

    # Slice the padded, concatenated logits back into per-task outputs.
    out_all = out.reshape(N, Cpad)
    outputs, off = [], 0
    for (_t, c) in task_class:
        outputs.append(out_all[:, off:off + c])
        off += c
    return outputs


# ------------------------------ parameter init ------------------------------ #

def init_params(key, cin=3, cout=64, task_class=((0, 10), (1, 5))):
    kconv, kfc = jax.random.split(key)
    # kaiming_normal_(mode='fan_out', nonlinearity='relu'): std = sqrt(2/(cout*9))
    std = (2.0 / (cout * 3 * 3)) ** 0.5
    conv1_w = std * jax.random.normal(kconv, (3, 3, cin, cout), jnp.float32)
    bn_gamma = jnp.ones((1, cout), jnp.float32)    # nn.init.constant_(weight, 1)
    bn_beta = jnp.zeros((1, cout), jnp.float32)    # nn.init.constant_(bias, 0)
    fc_w, fc_b = [], []
    bound = 1.0 / (64.0 ** 0.5)                    # nn.Linear(64, c) default init
    for (_t, c) in task_class:
        kfc, kw, kb = jax.random.split(kfc, 3)
        fc_w.append(jax.random.uniform(kw, (64, c), jnp.float32, -bound, bound))
        fc_b.append(jax.random.uniform(kb, (1, c), jnp.float32, -bound, bound))
    return {"conv1_w": conv1_w, "bn_gamma": bn_gamma, "bn_beta": bn_beta,
            "fc_w": fc_w, "fc_b": fc_b}


# ------------------------------ pure-JAX reference -------------------------- #

def _reference_forward(x_nchw, params, task_class):
    """f32 reference on bf16-rounded conv operands (matches kernel precision)."""
    x = jnp.transpose(x_nchw, (0, 2, 3, 1))
    xb = x.astype(jnp.bfloat16).astype(jnp.float32)
    wb = params["conv1_w"].astype(jnp.bfloat16).astype(jnp.float32)
    conv = jax.lax.conv_general_dilated(
        xb, wb, window_strides=(1, 1), padding=((1, 1), (1, 1)),
        dimension_numbers=("NHWC", "HWIO", "NHWC"))
    mean = jnp.mean(conv, axis=(0, 1, 2), keepdims=True)
    var = jnp.mean((conv - mean) ** 2, axis=(0, 1, 2), keepdims=True)
    gamma = params["bn_gamma"].reshape(1, 1, 1, -1)
    beta = params["bn_beta"].reshape(1, 1, 1, -1)
    z = jnp.maximum((conv - mean) * jax.lax.rsqrt(var + BN_EPS) * gamma + beta,
                    0.0)
    pooled = jax.lax.reduce_window(
        z, -jnp.inf, jax.lax.max, window_dimensions=(1, 3, 3, 1),
        window_strides=(1, 2, 2, 1), padding=((0, 0), (1, 1), (1, 1), (0, 0)))
    feat = jnp.mean(pooled, axis=(1, 2))
    return [feat @ params["fc_w"][t] + params["fc_b"][t]
            for (t, _c) in task_class]


if __name__ == "__main__":
    task_class = ((0, 10), (1, 5))
    key = jax.random.PRNGKey(0)
    kx, kp = jax.random.split(key)
    x = jax.random.normal(kx, (2, 3, 16, 16), jnp.float32)   # NCHW, like PyTorch
    params = init_params(kp, task_class=task_class)

    fwd = jax.jit(resnet_ltg_forward, static_argnums=2)
    outs = fwd(x, params, task_class)                        # t=0, task_arch=None
    outs = [jax.block_until_ready(o) for o in outs]

    assert outs[0].shape == (2, 10) and outs[0].dtype == jnp.float32
    assert outs[1].shape == (2, 5) and outs[1].dtype == jnp.float32
    assert all(bool(jnp.all(jnp.isfinite(o))) for o in outs)

    refs = _reference_forward(x, params, task_class)
    for o, r in zip(outs, refs):
        assert float(jnp.max(jnp.abs(o - r.astype(jnp.float32)))) < 2e-2

    print("KERNEL_OK")
</pallas_src>

<mosaic_0001>
module attributes {stable_mosaic.version = 11 : i64} {
  func.func @kernel(%arg0: i32, %arg1: i32, %arg2: memref<1x256x32xbf16, #tpu.memory_space<vmem>>, %arg3: memref<32x64xbf16, #tpu.memory_space<vmem>>, %arg4: memref<1x64xf32, #tpu.memory_space<vmem>>, %arg5: memref<1x64xf32, #tpu.memory_space<vmem>>, %arg6: memref<64x128xbf16, #tpu.memory_space<vmem>>, %arg7: memref<1x128xf32, #tpu.memory_space<vmem>>, %arg8: memref<1x1x128xf32, #tpu.memory_space<vmem>>, %arg9: memref<1x64xf32, #tpu.memory_space<vmem>>, %arg10: memref<1x64xf32, #tpu.memory_space<vmem>>) attributes {dimension_semantics = [#tpu.dimension_semantics<arbitrary>, #tpu.dimension_semantics<arbitrary>], iteration_bounds = array<i64: 2, 2>, scalar_prefetch = 0 : i64, scratch_operands = 2 : i64, tpu.core_type = #tpu.core_type<tc>, window_params = [{transform_indices = @transform_0, window_bounds = array<i64: 1, 256, 32>}, {pipeline_mode = #tpu.pipeline_mode<synchronous>, transform_indices = @transform_1, window_bounds = array<i64: 32, 64>}, {pipeline_mode = #tpu.pipeline_mode<synchronous>, transform_indices = @transform_2, window_bounds = array<i64: 1, 64>}, {pipeline_mode = #tpu.pipeline_mode<synchronous>, transform_indices = @transform_3, window_bounds = array<i64: 1, 64>}, {pipeline_mode = #tpu.pipeline_mode<synchronous>, transform_indices = @transform_4, window_bounds = array<i64: 64, 128>}, {pipeline_mode = #tpu.pipeline_mode<synchronous>, transform_indices = @transform_5, window_bounds = array<i64: 1, 128>}, {transform_indices = @transform_6, window_bounds = array<i64: 1, 1, 128>}]} {
    %c0 = arith.constant 0 : index
    %c0_0 = arith.constant 0 : index
    %c0_1 = arith.constant 0 : index
    %0 = vector.load %arg2[%c0, %c0_0, %c0_1] : memref<1x256x32xbf16, #tpu.memory_space<vmem>>, vector<1x256x32xbf16>
    %1 = vector.shape_cast %0 : vector<1x256x32xbf16> to vector<256x32xbf16>
    %c0_2 = arith.constant 0 : index
    %c0_3 = arith.constant 0 : index
    %2 = vector.load %arg3[%c0_2, %c0_3] : memref<32x64xbf16, #tpu.memory_space<vmem>>, vector<32x64xbf16>
    %cst = arith.constant dense<0.000000e+00> : vector<256x64xf32>
    %3 = tpu.matmul %1, %2, %cst {dimension_numbers = #tpu.dot_dimension_numbers<[1], [0], [0], [1], [0, 0, 1, 1], [], []>} : vector<256x32xbf16>, vector<32x64xbf16>, vector<256x64xf32> -> vector<256x64xf32>
    %c0_i32 = arith.constant 0 : i32
    %4 = arith.cmpi eq, %arg0, %c0_i32 : i32
    %c0_i32_4 = arith.constant 0 : i32
    %5 = arith.cmpi eq, %arg1, %c0_i32_4 : i32
    %6 = arith.andi %4, %5 : i1
    %7 = arith.extui %6 : i1 to i32
    %c0_i32_5 = arith.constant 0 : i32
    %8 = arith.cmpi ne, %7, %c0_i32_5 : i32
    scf.if %8 {
      %cst_9 = arith.constant 0.000000e+00 : f32
      %15 = vector.broadcast %cst_9 : f32 to vector<1x64xf32>
      %c0_10 = arith.constant 0 : index
      %c0_11 = arith.constant 0 : index
      %16 = vector.load %arg9[%c0_10, %c0_11] : memref<1x64xf32, #tpu.memory_space<vmem>>, vector<1x64xf32>
      tpu.vector_store %arg9[%c0_10, %c0_11], %15 {strides = array<i32>} : memref<1x64xf32, #tpu.memory_space<vmem>>, vector<1x64xf32>,
      %cst_12 = arith.constant 0.000000e+00 : f32
      %17 = vector.broadcast %cst_12 : f32 to vector<1x64xf32>
      %c0_13 = arith.constant 0 : index
      %c0_14 = arith.constant 0 : index
      %18 = vector.load %arg10[%c0_13, %c0_14] : memref<1x64xf32, #tpu.memory_space<vmem>>, vector<1x64xf32>
      tpu.vector_store %arg10[%c0_13, %c0_14], %17 {strides = array<i32>} : memref<1x64xf32, #tpu.memory_space<vmem>>, vector<1x64xf32>,
    } else {
    }
    %c0_i32_6 = arith.constant 0 : i32
    %9 = arith.cmpi eq, %arg0, %c0_i32_6 : i32
    %10 = arith.extui %9 : i1 to i32
    %c0_i32_7 = arith.constant 0 : i32
    %11 = arith.cmpi ne, %10, %c0_i32_7 : i32
    scf.if %11 {
      %c0_9 = arith.constant 0 : index
      %c0_10 = arith.constant 0 : index
      %15 = vector.load %arg9[%c0_9, %c0_10] : memref<1x64xf32, #tpu.memory_space<vmem>>, vector<1x64xf32>
      %cst_11 = arith.constant dense<0.000000e+00> : vector<64xf32>
      %16 = vector.multi_reduction <add>, %3, %cst_11 [0] : vector<256x64xf32> to vector<64xf32>
      %17 = vector.shape_cast %16 : vector<64xf32> to vector<1x64xf32>
      %18 = arith.addf %15, %17 : vector<1x64xf32>
      %c0_12 = arith.constant 0 : index
      %c0_13 = arith.constant 0 : index
      %19 = vector.load %arg9[%c0_12, %c0_13] : memref<1x64xf32, #tpu.memory_space<vmem>>, vector<1x64xf32>
      tpu.vector_store %arg9[%c0_12, %c0_13], %18 {strides = array<i32>} : memref<1x64xf32, #tpu.memory_space<vmem>>, vector<1x64xf32>,
      %c0_14 = arith.constant 0 : index
      %c0_15 = arith.constant 0 : index
      %20 = vector.load %arg10[%c0_14, %c0_15] : memref<1x64xf32, #tpu.memory_space<vmem>>, vector<1x64xf32>
      %21 = arith.mulf %3, %3 : vector<256x64xf32>
      %cst_16 = arith.constant dense<0.000000e+00> : vector<64xf32>
      %22 = vector.multi_reduction <add>, %21, %cst_16 [0] : vector<256x64xf32> to vector<64xf32>
      %23 = vector.shape_cast %22 : vector<64xf32> to vector<1x64xf32>
      %24 = arith.addf %20, %23 : vector<1x64xf32>
      %c0_17 = arith.constant 0 : index
      %c0_18 = arith.constant 0 : index
      %25 = vector.load %arg10[%c0_17, %c0_18] : memref<1x64xf32, #tpu.memory_space<vmem>>, vector<1x64xf32>
      tpu.vector_store %arg10[%c0_17, %c0_18], %24 {strides = array<i32>} : memref<1x64xf32, #tpu.memory_space<vmem>>, vector<1x64xf32>,
    } else {
    }
    %c1_i32 = arith.constant 1 : i32
    %12 = arith.cmpi eq, %arg0, %c1_i32 : i32
    %13 = arith.extui %12 : i1 to i32
    %c0_i32_8 = arith.constant 0 : i32
    %14 = arith.cmpi ne, %13, %c0_i32_8 : i32
    scf.if %14 {
      %c0_9 = arith.constant 0 : index
      %c0_10 = arith.constant 0 : index
      %15 = vector.load %arg9[%c0_9, %c0_10] : memref<1x64xf32, #tpu.memory_space<vmem>>, vector<1x64xf32>
      %cst_11 = arith.constant 0.001953125 : f32
      %16 = vector.broadcast %cst_11 : f32 to vector<1x64xf32>
      %17 = arith.mulf %15, %16 : vector<1x64xf32>
      %c0_12 = arith.constant 0 : index
      %c0_13 = arith.constant 0 : index
      %18 = vector.load %arg10[%c0_12, %c0_13] : memref<1x64xf32, #tpu.memory_space<vmem>>, vector<1x64xf32>
      %cst_14 = arith.constant 0.001953125 : f32
      %19 = vector.broadcast %cst_14 : f32 to vector<1x64xf32>
      %20 = arith.mulf %18, %19 : vector<1x64xf32>
      %21 = arith.mulf %17, %17 : vector<1x64xf32>
      %22 = arith.subf %20, %21 : vector<1x64xf32>
      %cst_15 = arith.constant 0.000000e+00 : f32
      %23 = vector.broadcast %cst_15 : f32 to vector<1x64xf32>
      %24 = arith.maximumf %22, %23 : vector<1x64xf32>
      %c0_16 = arith.constant 0 : index
      %c0_17 = arith.constant 0 : index
      %25 = vector.load %arg4[%c0_16, %c0_17] : memref<1x64xf32, #tpu.memory_space<vmem>>, vector<1x64xf32>
      %cst_18 = arith.constant 9.99999974E-6 : f32
      %26 = vector.broadcast %cst_18 : f32 to vector<1x64xf32>
      %27 = arith.addf %24, %26 : vector<1x64xf32>
      %28 = math.rsqrt %27 : vector<1x64xf32>
      %29 = arith.mulf %25, %28 : vector<1x64xf32>
      %c0_19 = arith.constant 0 : index
      %c0_20 = arith.constant 0 : index
      %30 = vector.load %arg5[%c0_19, %c0_20] : memref<1x64xf32, #tpu.memory_space<vmem>>, vector<1x64xf32>
      %31 = arith.mulf %17, %29 : vector<1x64xf32>
      %32 = arith.subf %30, %31 : vector<1x64xf32>
      %33 = vector.broadcast %29 : vector<1x64xf32> to vector<256x64xf32>
      %34 = arith.mulf %3, %33 : vector<256x64xf32>
      %35 = vector.broadcast %32 : vector<1x64xf32> to vector<256x64xf32>
      %36 = arith.addf %34, %35 : vector<256x64xf32>
      %cst_21 = arith.constant 0.000000e+00 : f32
      %37 = vector.broadcast %cst_21 : f32 to vector<256x64xf32>
      %38 = arith.maximumf %36, %37 : vector<256x64xf32>
      %39 = vector.shape_cast %38 : vector<256x64xf32> to vector<1x8x2x16x64xf32>
      %40 = vector.extract_strided_slice %39 {offsets = [0, 0, 0, 0, 0], sizes = [1, 8, 1, 16, 64], strides = [1, 1, 1, 1, 1]} : vector<1x8x2x16x64xf32> to vector<1x8x1x16x64xf32>
      %41 = vector.shape_cast %40 : vector<1x8x1x16x64xf32> to vector<1x8x16x64xf32>
      %42 = vector.extract_strided_slice %39 {offsets = [0, 0, 1, 0, 0], sizes = [1, 8, 1, 16, 64], strides = [1, 1, 1, 1, 1]} : vector<1x8x2x16x64xf32> to vector<1x8x1x16x64xf32>
      %43 = vector.shape_cast %42 : vector<1x8x1x16x64xf32> to vector<1x8x16x64xf32>
      %44 = arith.maximumf %41, %43 : vector<1x8x16x64xf32>
      %45 = vector.extract_strided_slice %44 {offsets = [0, 0, 0, 0], sizes = [1, 1, 16, 64], strides = [1, 1, 1, 1]} : vector<1x8x16x64xf32> to vector<1x1x16x64xf32>
      %46 = vector.extract_strided_slice %44 {offsets = [0, 1, 0, 0], sizes = [1, 7, 16, 64], strides = [1, 1, 1, 1]} : vector<1x8x16x64xf32> to vector<1x7x16x64xf32>
      %47 = vector.extract_strided_slice %43 {offsets = [0, 0, 0, 0], sizes = [1, 7, 16, 64], strides = [1, 1, 1, 1]} : vector<1x8x16x64xf32> to vector<1x7x16x64xf32>
      %48 = arith.maximumf %46, %47 : vector<1x7x16x64xf32>
      %49 = tpu.concatenate %45, %48 in 1 : vector<1x1x16x64xf32>, vector<1x7x16x64xf32> -> vector<1x8x16x64xf32>
      %50 = vector.shape_cast %49 : vector<1x8x16x64xf32> to vector<1x8x8x2x64xf32>
      %51 = vector.extract_strided_slice %50 {offsets = [0, 0, 0, 0, 0], sizes = [1, 8, 8, 1, 64], strides = [1, 1, 1, 1, 1]} : vector<1x8x8x2x64xf32> to vector<1x8x8x1x64xf32>
      %52 = vector.shape_cast %51 : vector<1x8x8x1x64xf32> to vector<1x8x8x64xf32>
      %53 = vector.extract_strided_slice %50 {offsets = [0, 0, 0, 1, 0], sizes = [1, 8, 8, 1, 64], strides = [1, 1, 1, 1, 1]} : vector<1x8x8x2x64xf32> to vector<1x8x8x1x64xf32>
      %54 = vector.shape_cast %53 : vector<1x8x8x1x64xf32> to vector<1x8x8x64xf32>
      %55 = arith.maximumf %52, %54 : vector<1x8x8x64xf32>
      %56 = vector.extract_strided_slice %55 {offsets = [0, 0, 0, 0], sizes = [1, 8, 1, 64], strides = [1, 1, 1, 1]} : vector<1x8x8x64xf32> to vector<1x8x1x64xf32>
      %57 = vector.extract_strided_slice %55 {offsets = [0, 0, 1, 0], sizes = [1, 8, 7, 64], strides = [1, 1, 1, 1]} : vector<1x8x8x64xf32> to vector<1x8x7x64xf32>
      %58 = vector.extract_strided_slice %54 {offsets = [0, 0, 0, 0], sizes = [1, 8, 7, 64], strides = [1, 1, 1, 1]} : vector<1x8x8x64xf32> to vector<1x8x7x64xf32>
      %59 = arith.maximumf %57, %58 : vector<1x8x7x64xf32>
      %60 = tpu.concatenate %56, %59 in 2 : vector<1x8x1x64xf32>, vector<1x8x7x64xf32> -> vector<1x8x8x64xf32>
      %cst_22 = arith.constant dense<0.000000e+00> : vector<1x64xf32>
      %61 = vector.multi_reduction <add>, %60, %cst_22 [1, 2] : vector<1x8x8x64xf32> to vector<1x64xf32>
      %cst_23 = arith.constant 1.562500e-02 : f32
      %62 = vector.broadcast %cst_23 : f32 to vector<1x64xf32>
      %63 = arith.mulf %61, %62 : vector<1x64xf32>
      %64 = arith.truncf %63 : vector<1x64xf32> to vector<1x64xbf16>
      %c0_24 = arith.constant 0 : index
      %c0_25 = arith.constant 0 : index
      %65 = vector.load %arg6[%c0_24, %c0_25] : memref<64x128xbf16, #tpu.memory_space<vmem>>, vector<64x128xbf16>
      %cst_26 = arith.constant dense<0.000000e+00> : vector<1x128xf32>
      %66 = tpu.matmul %64, %65, %cst_26 {dimension_numbers = #tpu.dot_dimension_numbers<[1], [0], [0], [1], [0, 0, 1, 1], [], []>} : vector<1x64xbf16>, vector<64x128xbf16>, vector<1x128xf32> -> vector<1x128xf32>
      %c0_27 = arith.constant 0 : index
      %c0_28 = arith.constant 0 : index
      %67 = vector.load %arg7[%c0_27, %c0_28] : memref<1x128xf32, #tpu.memory_space<vmem>>, vector<1x128xf32>
      %68 = arith.addf %66, %67 : vector<1x128xf32>
      %69 = vector.shape_cast %68 : vector<1x128xf32> to vector<1x1x128xf32>
      %c0_29 = arith.constant 0 : index
      %c0_30 = arith.constant 0 : index
      %c0_31 = arith.constant 0 : index
      %70 = vector.load %arg8[%c0_29, %c0_30, %c0_31] : memref<1x1x128xf32, #tpu.memory_space<vmem>>, vector<1x1x128xf32>
      tpu.vector_store %arg8[%c0_29, %c0_30, %c0_31], %69 {strides = array<i32>} : memref<1x1x128xf32, #tpu.memory_space<vmem>>, vector<1x1x128xf32>,
    } else {
    }
    return
  }
  func.func @transform_0(%arg0: i32, %arg1: i32) -> (i32, i32, i32) {
    %c0_i32 = arith.constant 0 : i32
    %c0_i32_0 = arith.constant 0 : i32
    %c0_i32_1 = arith.constant 0 : i32
    return %arg1, %c0_i32, %c0_i32_0 : i32, i32, i32
  }
  func.func @transform_1(%arg0: i32, %arg1: i32) -> (i32, i32) {
    %c0_i32 = arith.constant 0 : i32
    %c0_i32_0 = arith.constant 0 : i32
    %c0_i32_1 = arith.constant 0 : i32
    return %c0_i32, %c0_i32_0 : i32, i32
  }
  func.func @transform_2(%arg0: i32, %arg1: i32) -> (i32, i32) {
    %c0_i32 = arith.constant 0 : i32
    %c0_i32_0 = arith.constant 0 : i32
    %c0_i32_1 = arith.constant 0 : i32
    return %c0_i32, %c0_i32_0 : i32, i32
  }
  func.func @transform_3(%arg0: i32, %arg1: i32) -> (i32, i32) {
    %c0_i32 = arith.constant 0 : i32
    %c0_i32_0 = arith.constant 0 : i32
    %c0_i32_1 = arith.constant 0 : i32
    return %c0_i32, %c0_i32_0 : i32, i32
  }
  func.func @transform_4(%arg0: i32, %arg1: i32) -> (i32, i32) {
    %c0_i32 = arith.constant 0 : i32
    %c0_i32_0 = arith.constant 0 : i32
    %c0_i32_1 = arith.constant 0 : i32
    return %c0_i32, %c0_i32_0 : i32, i32
  }
  func.func @transform_5(%arg0: i32, %arg1: i32) -> (i32, i32) {
    %c0_i32 = arith.constant 0 : i32
    %c0_i32_0 = arith.constant 0 : i32
    %c0_i32_1 = arith.constant 0 : i32
    return %c0_i32, %c0_i32_0 : i32, i32
  }
  func.func @transform_6(%arg0: i32, %arg1: i32) -> (i32, i32, i32) {
    %0 = arith.muli %arg1, %arg0 : i32
    %c0_i32 = arith.constant 0 : i32
    %c0_i32_0 = arith.constant 0 : i32
    %c0_i32_1 = arith.constant 0 : i32
    return %0, %c0_i32, %c0_i32_0 : i32, i32, i32
  }
}

</mosaic_0001>

<llo_original>
// kernel: resnet_ltg_forward.1
$region0: #{resnet_ltg_forward.1}
  #allocation0 [shape = 'u32[]', space=smem, size = 0x4, offset = 0x4, fixed_abs, tag = 'smem constant byte address 0x4 - core index']
  #allocation1 [shape = 'u32[144,128]{1,0:T(1,128)}', space=vmem, size = 0x12000, scoped, tag = 'internal scratch']
  #allocation2 [shape = 'f32[1,64]{1,0:T(1,128)}', space=vmem, size = 0x200, scoped, tag = 'scratch operand']
  #allocation3 [shape = 'f32[1,64]{1,0:T(1,128)}', space=vmem, size = 0x200, scoped, tag = 'scratch operand']
  %s0 = inlined_call_operand.vmem [shape: bf16[2,256,32], index: 0, kind: input, shape index: {}]
  %s1 = inlined_call_operand.vmem [shape: bf16[32,64], index: 1, kind: input, shape index: {}]
  %s2 = inlined_call_operand.vmem [shape: f32[1,64], index: 2, kind: input, shape index: {}]
  %s3 = inlined_call_operand.vmem [shape: f32[1,64], index: 3, kind: input, shape index: {}]
  %s4 = inlined_call_operand.vmem [shape: bf16[64,128], index: 4, kind: input, shape index: {}]
  %s5 = inlined_call_operand.vmem [shape: f32[1,128], index: 5, kind: input, shape index: {}]
  %s6 = inlined_call_operand.vmem [shape: f32[2,1,128], index: 6, kind: output, shape index: {}]
  %s7 = sld [smem:[#allocation0]]
  $region69: #{resnet_ltg_forward.1} parent=0
    _
  %s9 = ssub.s32 1, %s7
  %s10 = scalar_select 0, %s9, %s7
  loop: start=0, step=1, limit=6
  $region2: #{resnet_ltg_forward.1} parent=0 // loop_pre_header
    _
  $region3: #{resnet_ltg_forward.1} parent=0 // loop_header
    %s12 = sphi 0, %s16
    %p13 = scmp.ge.s32.totalorder %s12, 6
    %s19 = sphi 0, %s31
    %s20 = sphi 0, %s27
    %s21 = sphi 0, %s19
    %s22 = sphi 0, %s20
    %s23 = sphi 0, %s21
    %s24 = sphi 0, %s22
    %s34 = sphi 0, %s36
    %s37 = sphi 0, %s34
    %s38 = sphi 0, %s37
    %s54 = sphi 0, %s38
    %s58 = sphi 0, %s58
    %s60 = sphi 0, %s58
    %s61 = sphi 0, %s60
    %s75 = sphi 0, %s61
    %s79 = sphi 0, %s79
    %s81 = sphi 0, %s79
    %s82 = sphi 0, %s81
    %s96 = sphi 0, %s82
    %s100 = sphi 0, %s100
    %s102 = sphi 0, %s100
    %s103 = sphi 0, %s102
    %s117 = sphi 0, %s103
    %s121 = sphi 0, %s121
    %s123 = sphi 0, %s121
    %s124 = sphi 0, %s123
    %s138 = sphi 0, %s124
    %s142 = sphi 0, %s142
    %s144 = sphi 0, %s142
    %s145 = sphi 0, %s144
    %s159 = sphi 0, %s145
    %s167 = sphi 0, %s169
    %s170 = sphi 0, %s167
    %s171 = sphi 0, %s170
    %s187 = sphi 0, %s171
  $region4: #{resnet_ltg_forward.1} parent=0 // loop_header_branch
    %15 = sbr.rel (%p13) target = $region8
  $region5: #{resnet_ltg_forward.1} parent=0 // loop_body
    %s17 = ssub.s32 %s12, 1
    %s18 = ssub.s32 %s12, 2
    %s25 = sadd.s32 1, %s20
    %p26 = scmp.ge.s32.totalorder %s25, 2
    %s27 = scalar_select %p26, 0, %s25
    %s28 = sadd.s32 1, %s19
    %s29 = scalar_select %p26, %s28, %s19
    %p30 = scmp.ge.s32.totalorder %s29, 2
    %s31 = scalar_select %p30, 0, %s29
    %s32 = ssub.s32 %s20, %s27
    %p33 = scmp.eq.s32.totalorder %s32, 0
    %s35 = sadd.s32 %s34, 1
    %s36 = scalar_select %p33, %s34, %s35
    %p39 = pneg %p33
    %p40 = scmp.eq.s32.totalorder %s12, 3
    %p41 = por %p39, %p40
    %p42 = scmp.ne.s32.totalorder %s34, %s37
    %p43 = scmp.eq.s32.totalorder %s12, 0
    %p44 = por %p42, %p43
    %p45 = scmp.ne.s32.totalorder %s34, %s37
    %p46 = scmp.eq.s32.totalorder %s17, 3
    %p47 = por %p45, %p46
    %p48 = scmp.ne.s32.totalorder %s37, %s38
    %p49 = scmp.eq.s32.totalorder %s17, 0
    %p50 = por %p48, %p49
    %p51 = scmp.ne.s32.totalorder %s37, %s38
    %p52 = scmp.eq.s32.totalorder %s18, 3
    %p53 = por %p51, %p52
    %p55 = scmp.ne.s32.totalorder %s38, %s54
    %p56 = scmp.eq.s32.totalorder %s18, 0
    %p57 = por %p55, %p56
    %s59 = sadd.s32 %s58, 1
    %p62 = scmp.eq.s32.totalorder %s12, 3
    %p63 = scmp.ne.s32.totalorder %s58, %s60
    %p64 = scmp.eq.s32.totalorder %s12, 0
    %p65 = por %p63, %p64
    %p66 = scmp.ne.s32.totalorder %s58, %s60
    %p67 = scmp.eq.s32.totalorder %s17, 3
    %p68 = por %p66, %p67
    %p69 = scmp.ne.s32.totalorder %s60, %s61
    %p70 = scmp.eq.s32.totalorder %s17, 0
    %p71 = por %p69, %p70
    %p72 = scmp.ne.s32.totalorder %s60, %s61
    %p73 = scmp.eq.s32.totalorder %s18, 3
    %p74 = por %p72, %p73
    %p76 = scmp.ne.s32.totalorder %s61, %s75
    %p77 = scmp.eq.s32.totalorder %s18, 0
    %p78 = por %p76, %p77
    %s80 = sadd.s32 %s79, 1
    %p83 = scmp.eq.s32.totalorder %s12, 3
    %p84 = scmp.ne.s32.totalorder %s79, %s81
    %p85 = scmp.eq.s32.totalorder %s12, 0
    %p86 = por %p84, %p85
    %p87 = scmp.ne.s32.totalorder %s79, %s81
    %p88 = scmp.eq.s32.totalorder %s17, 3
    %p89 = por %p87, %p88
    %p90 = scmp.ne.s32.totalorder %s81, %s82
    %p91 = scmp.eq.s32.totalorder %s17, 0
    %p92 = por %p90, %p91
    %p93 = scmp.ne.s32.totalorder %s81, %s82
    %p94 = scmp.eq.s32.totalorder %s18, 3
    %p95 = por %p93, %p94
    %p97 = scmp.ne.s32.totalorder %s82, %s96
    %p98 = scmp.eq.s32.totalorder %s18, 0
    %p99 = por %p97, %p98
    %s101 = sadd.s32 %s100, 1
    %p104 = scmp.eq.s32.totalorder %s12, 3
    %p105 = scmp.ne.s32.totalorder %s100, %s102
    %p106 = scmp.eq.s32.totalorder %s12, 0
    %p107 = por %p105, %p106
    %p108 = scmp.ne.s32.totalorder %s100, %s102
    %p109 = scmp.eq.s32.totalorder %s17, 3
    %p110 = por %p108, %p109
    %p111 = scmp.ne.s32.totalorder %s102, %s103
    %p112 = scmp.eq.s32.totalorder %s17, 0
    %p113 = por %p111, %p112
    %p114 = scmp.ne.s32.totalorder %s102, %s103
    %p115 = scmp.eq.s32.totalorder %s18, 3
    %p116 = por %p114, %p115
    %p118 = scmp.ne.s32.totalorder %s103, %s117
    %p119 = scmp.eq.s32.totalorder %s18, 0
    %p120 = por %p118, %p119
    %s122 = sadd.s32 %s121, 1
    %p125 = scmp.eq.s32.totalorder %s12, 3
    %p126 = scmp.ne.s32.totalorder %s121, %s123
    %p127 = scmp.eq.s32.totalorder %s12, 0
    %p128 = por %p126, %p127
    %p129 = scmp.ne.s32.totalorder %s121, %s123
    %p130 = scmp.eq.s32.totalorder %s17, 3
    %p131 = por %p129, %p130
    %p132 = scmp.ne.s32.totalorder %s123, %s124
    %p133 = scmp.eq.s32.totalorder %s17, 0
    %p134 = por %p132, %p133
    %p135 = scmp.ne.s32.totalorder %s123, %s124
    %p136 = scmp.eq.s32.totalorder %s18, 3
    %p137 = por %p135, %p136
    %p139 = scmp.ne.s32.totalorder %s124, %s138
    %p140 = scmp.eq.s32.totalorder %s18, 0
    %p141 = por %p139, %p140
    %s143 = sadd.s32 %s142, 1
    %p146 = scmp.eq.s32.totalorder %s12, 3
    %p147 = scmp.ne.s32.totalorder %s142, %s144
    %p148 = scmp.eq.s32.totalorder %s12, 0
    %p149 = por %p147, %p148
    %p150 = scmp.ne.s32.totalorder %s142, %s144
    %p151 = scmp.eq.s32.totalorder %s17, 3
    %p152 = por %p150, %p151
    %p153 = scmp.ne.s32.totalorder %s144, %s145
    %p154 = scmp.eq.s32.totalorder %s17, 0
    %p155 = por %p153, %p154
    %p156 = scmp.ne.s32.totalorder %s144, %s145
    %p157 = scmp.eq.s32.totalorder %s18, 3
    %p158 = por %p156, %p157
    %p160 = scmp.ne.s32.totalorder %s145, %s159
    %p161 = scmp.eq.s32.totalorder %s18, 0
    %p162 = por %p160, %p161
    %s163 = smul.u32 %s20, %s19
    %s164 = smul.u32 %s27, %s31
    %s165 = ssub.s32 %s163, %s164
    %p166 = scmp.eq.s32.totalorder %s165, 0
    %s168 = sadd.s32 %s167, 1
    %s169 = scalar_select %p166, %s167, %s168
    %p172 = pneg %p166
    %p173 = scmp.eq.s32.totalorder %s12, 3
    %p174 = por %p172, %p173
    %p175 = scmp.ne.s32.totalorder %s167, %s170
    %p176 = scmp.eq.s32.totalorder %s12, 0
    %p177 = por %p175, %p176
    %p178 = scmp.ne.s32.totalorder %s167, %s170
    %p179 = scmp.eq.s32.totalorder %s17, 3
    %p180 = por %p178, %p179
    %p181 = scmp.ne.s32.totalorder %s170, %s171
    %p182 = scmp.eq.s32.totalorder %s17, 0
    %p183 = por %p181, %p182
    %p184 = scmp.ne.s32.totalorder %s170, %s171
    %p185 = scmp.eq.s32.totalorder %s18, 3
    %p186 = por %p184, %p185
    %p188 = scmp.ne.s32.totalorder %s171, %s187
    %p189 = scmp.eq.s32.totalorder %s18, 0
    %p190 = por %p188, %p189
    %p191 = scmp.le.s32.totalorder 1, %s12
    %p192 = scmp.lt.s32.totalorder %s12, 5
    %p193 = pnand %p191, %p192
    %p194 = pneg %p193
    // Predicated region
    $region9: #{resnet_ltg_forward.1} parent=5 // pred_check
      _
    $region10: #{resnet_ltg_forward.1} parent=5 // pred_check_branch
      %196 = sbr.rel (%p193) target = $region12
    $region11: #{resnet_ltg_forward.1} parent=5 // pred_region
      %s197 = ssub.s32 %s12, 1
      // Predicated region
      $region13: #{resnet_ltg_forward.1} parent=11 // pred_check
        %p198 = pneg %p71
      $region14: #{resnet_ltg_forward.1} parent=11 // pred_check_branch
        %200 = sbr.rel (%p198) target = $region16
      $region15: #{resnet_ltg_forward.1} parent=11 // pred_region
        _
      $region16: #{resnet_ltg_forward.1} parent=11 // pred_fallthru
        _
      // Predicated region
      $region17: #{resnet_ltg_forward.1} parent=11 // pred_check
        %p201 = pneg %p92
      $region18: #{resnet_ltg_forward.1} parent=11 // pred_check_branch
        %203 = sbr.rel (%p201) target = $region20
      $region19: #{resnet_ltg_forward.1} parent=11 // pred_region
        _
      $region20: #{resnet_ltg_forward.1} parent=11 // pred_fallthru
        _
      // Predicated region
      $region21: #{resnet_ltg_forward.1} parent=11 // pred_check
        %p204 = pneg %p113
      $region22: #{resnet_ltg_forward.1} parent=11 // pred_check_branch
        %206 = sbr.rel (%p204) target = $region24
      $region23: #{resnet_ltg_forward.1} parent=11 // pred_region
        _
      $region24: #{resnet_ltg_forward.1} parent=11 // pred_fallthru
        _
      // Predicated region
      $region25: #{resnet_ltg_forward.1} parent=11 // pred_check
        %p207 = pneg %p134
      $region26: #{resnet_ltg_forward.1} parent=11 // pred_check_branch
        %209 = sbr.rel (%p207) target = $region28
      $region27: #{resnet_ltg_forward.1} parent=11 // pred_region
        _
      $region28: #{resnet_ltg_forward.1} parent=11 // pred_fallthru
        _
      // Predicated region
      $region29: #{resnet_ltg_forward.1} parent=11 // pred_check
        %p210 = pneg %p155
      $region30: #{resnet_ltg_forward.1} parent=11 // pred_check_branch
        %212 = sbr.rel (%p210) target = $region32
      $region31: #{resnet_ltg_forward.1} parent=11 // pred_region
        _
      $region32: #{resnet_ltg_forward.1} parent=11 // pred_fallthru
        _
    $region12: #{resnet_ltg_forward.1} parent=5 // pred_fallthru
      _
    %p213 = scmp.lt.s32.totalorder %s12, 4
    // Predicated region
    $region33: #{resnet_ltg_forward.1} parent=5 // pred_check
      %p214 = pneg %p213
    $region34: #{resnet_ltg_forward.1} parent=5 // pred_check_branch
      %216 = sbr.rel (%p214) target = $region36
    $region35: #{resnet_ltg_forward.1} parent=5 // pred_region
      // Predicated region
      $region37: #{resnet_ltg_forward.1} parent=35 // pred_check
        %p217 = pneg %p44
      $region38: #{resnet_ltg_forward.1} parent=35 // pred_check_branch
        %219 = sbr.rel (%p217) target = $region40
      $region39: #{resnet_ltg_forward.1} parent=35 // pred_region
        %p220 = scmp.lt.s32.totalorder %s20, 1
        %s221 = scalar_select %p220, %s20, 1
        %s222 = smul.addr %s221, 32
        %s223 = smul.addr %s222, 4
        %s224 = scalar_lea.vmem %s0, %s223
      $region40: #{resnet_ltg_forward.1} parent=35 // pred_fallthru
        _
    $region36: #{resnet_ltg_forward.1} parent=5 // pred_fallthru
      _
    %p225 = scmp.le.s32.totalorder 1, %s12
    %p226 = scmp.lt.s32.totalorder %s12, 5
    %p227 = pnand %p225, %p226
    %p228 = pneg %p227
    // Predicated region
    $region41: #{resnet_ltg_forward.1} parent=5 // pred_check
      _
    $region42: #{resnet_ltg_forward.1} parent=5 // pred_check_branch
      %230 = sbr.rel (%p227) target = $region44
    $region43: #{resnet_ltg_forward.1} parent=5 // pred_region
      %s231 = ssub.s32 %s12, 1
      %p232 = scmp.lt.s32.totalorder %s22, 1
      %s233 = scalar_select %p232, %s22, 1
      %s234 = smul.addr %s233, 32
      %s235 = smul.addr %s234, 4
      %s236 = scalar_lea.vmem %s0, %s235
      %p237 = pneg %p50
      %p238 = pneg %p47
      %p239 = pneg %p71
      %p240 = pneg %p68
      %p241 = pneg %p92
      %p242 = pneg %p89
      %p243 = pneg %p113
      %p244 = pneg %p110
      %p245 = pneg %p134
      %p246 = pneg %p131
      %p247 = pneg %p155
      %p248 = pneg %p152
      %p249 = pneg %p183
      %p250 = pneg %p180
      %s251 = smul.u32 %s22, %s21
      %p252 = scmp.lt.s32.totalorder %s251, 1
      %s253 = scalar_select %p252, %s251, 1
      %s254 = scalar_lea.vmem %s6, %s253
      %p255 = scmp.lt.s32.totalorder %s22, 1
      %s256 = scalar_select %p255, %s22, 1
      %s257 = smul.addr %s256, 32
      %s258 = smul.addr %s257, 4
      %s259 = scalar_lea.vmem %s0, %s258
      %s260 = smul.u32 %s22, %s21
      %p261 = scmp.lt.s32.totalorder %s260, 1
      %s262 = scalar_select %p261, %s260, 1
      %s263 = scalar_lea.vmem %s6, %s262
      %s264 = smul.u32 %s22, %s21
      %v266 = vld [vmem:[%s259] sm:$0xf]
      %v267 = vld [vmem:[%s259 + $0x4] sm:$0xf]
      %v268 = vld [vmem:[%s259 + $0x8] sm:$0xf]
      %v269 = vld [vmem:[%s259 + $0xc] sm:$0xf]
      %v270 = vld [vmem:[%s259 + $0x10] sm:$0xf]
      %v271 = vld [vmem:[%s259 + $0x14] sm:$0xf]
      %v272 = vld [vmem:[%s259 + $0x18] sm:$0xf]
      %v273 = vld [vmem:[%s259 + $0x1c] sm:$0xf]
      %v274 = vld [vmem:[%s259 + $0x20] sm:$0xf]
      %v275 = vld [vmem:[%s259 + $0x24] sm:$0xf]
      %v276 = vld [vmem:[%s259 + $0x28] sm:$0xf]
      %v277 = vld [vmem:[%s259 + $0x2c] sm:$0xf]
      %v278 = vld [vmem:[%s259 + $0x30] sm:$0xf]
      %v279 = vld [vmem:[%s259 + $0x34] sm:$0xf]
      %v280 = vld [vmem:[%s259 + $0x38] sm:$0xf]
      %v281 = vld [vmem:[%s259 + $0x3c] sm:$0xf]
      %v282 = vld [vmem:[%s259 + $0x40] sm:$0xf]
      %v283 = vld [vmem:[%s259 + $0x44] sm:$0xf]
      %v284 = vld [vmem:[%s259 + $0x48] sm:$0xf]
      %v285 = vld [vmem:[%s259 + $0x4c] sm:$0xf]
      %v286 = vld [vmem:[%s259 + $0x50] sm:$0xf]
      %v287 = vld [vmem:[%s259 + $0x54] sm:$0xf]
      %v288 = vld [vmem:[%s259 + $0x58] sm:$0xf]
      %v289 = vld [vmem:[%s259 + $0x5c] sm:$0xf]
      %v290 = vld [vmem:[%s259 + $0x60] sm:$0xf]
      %v291 = vld [vmem:[%s259 + $0x64] sm:$0xf]
      %v292 = vld [vmem:[%s259 + $0x68] sm:$0xf]
      %v293 = vld [vmem:[%s259 + $0x6c] sm:$0xf]
      %v294 = vld [vmem:[%s259 + $0x70] sm:$0xf]
      %v295 = vld [vmem:[%s259 + $0x74] sm:$0xf]
      %v296 = vld [vmem:[%s259 + $0x78] sm:$0xf]
      %v297 = vld [vmem:[%s259 + $0x7c] sm:$0xf]
      %v298 = vld [vmem:[%s1] sm:$0xf]
      %v299 = vld [vmem:[%s1 + $0x4] sm:$0xf]
      %v300 = vld [vmem:[%s1 + $0x8] sm:$0xf]
      %v301 = vld [vmem:[%s1 + $0xc] sm:$0xf]
      %v334 = vunpack.c.l.b16 %v266
      %v335 = vunpack.c.l.b16 %v267
      %v336 = vunpack.c.l.b16 %v268
      %v337 = vunpack.c.l.b16 %v269
      %v338 = vunpack.c.l.b16 %v270
      %v339 = vunpack.c.l.b16 %v271
      %v340 = vunpack.c.l.b16 %v272
      %v341 = vunpack.c.l.b16 %v273
      %v342 = vunpack.c.l.b16 %v274
      %v343 = vunpack.c.l.b16 %v275
      %v344 = vunpack.c.l.b16 %v276
      %v345 = vunpack.c.l.b16 %v277
      %v346 = vunpack.c.l.b16 %v278
      %v347 = vunpack.c.l.b16 %v279
      %v348 = vunpack.c.l.b16 %v280
      %v349 = vunpack.c.l.b16 %v281
      %v350 = vunpack.c.l.b16 %v282
      %v351 = vunpack.c.l.b16 %v283
      %v352 = vunpack.c.l.b16 %v284
      %v353 = vunpack.c.l.b16 %v285
      %v354 = vunpack.c.l.b16 %v286
      %v355 = vunpack.c.l.b16 %v287
      %v356 = vunpack.c.l.b16 %v288
      %v357 = vunpack.c.l.b16 %v289
      %v358 = vunpack.c.l.b16 %v290
      %v359 = vunpack.c.l.b16 %v291
      %v360 = vunpack.c.l.b16 %v292
      %v361 = vunpack.c.l.b16 %v293
      %v362 = vunpack.c.l.b16 %v294
      %v363 = vunpack.c.l.b16 %v295
      %v364 = vunpack.c.l.b16 %v296
      %v365 = vunpack.c.l.b16 %v297
      %v366 = vpack.c.b16 %v335, %v334
      %v367 = vpack.c.b16 %v337, %v336
      %v368 = vpack.c.b16 %v339, %v338
      %v369 = vpack.c.b16 %v341, %v340
      %v370 = vpack.c.b16 %v343, %v342
      %v371 = vpack.c.b16 %v345, %v344
      %v372 = vpack.c.b16 %v347, %v346
      %v373 = vpack.c.b16 %v349, %v348
      %v374 = vpack.c.b16 %v351, %v350
      %v375 = vpack.c.b16 %v353, %v352
      %v376 = vpack.c.b16 %v355, %v354
      %v377 = vpack.c.b16 %v357, %v356
      %v378 = vpack.c.b16 %v359, %v358
      %v379 = vpack.c.b16 %v361, %v360
      %v380 = vpack.c.b16 %v363, %v362
      %v381 = vpack.c.b16 %v365, %v364
      %v386 = vunpack.c.l.b16 %v298
      %v387 = vunpack.c.l.b16 %v299
      %v388 = vunpack.c.l.b16 %v300
      %v389 = vunpack.c.l.b16 %v301
      %v390 = vpack.c.b16 %v387, %v386
      %v391 = vpack.c.b16 %v389, %v388
      %vm394 = vcmask 261120
      %v396 = vsel %vm394, %v366, 0
      %v399 = vsel %vm394, %v367, 0
      %v402 = vsel %vm394, %v368, 0
      %v405 = vsel %vm394, %v369, 0
      %v408 = vsel %vm394, %v370, 0
      %v411 = vsel %vm394, %v371, 0
      %v414 = vsel %vm394, %v372, 0
      %v417 = vsel %vm394, %v373, 0
      %v420 = vsel %vm394, %v374, 0
      %v423 = vsel %vm394, %v375, 0
      %v426 = vsel %vm394, %v376, 0
      %v429 = vsel %vm394, %v377, 0
      %v432 = vsel %vm394, %v378, 0
      %v435 = vsel %vm394, %v379, 0
      %v438 = vsel %vm394, %v380, 0
      %v441 = vsel %vm394, %v381, 0
      %443 = vmatprep.subr.bf16.mxu0 0
      %444 = vmatpush1.bf16.msra.mxu0 0
      %445 = vmatprep.subr.bf16.mxu0 0
      %446 = vmatpush1.bf16.msra.mxu0 0
      %447 = vmatprep.subr.bf16.mxu0 0
      %448 = vmatpush1.bf16.msra.mxu0 0
      %449 = vmatprep.subr.bf16.mxu0 0
      %450 = vmatpush1.bf16.msra.mxu0 0
      %451 = vmatprep.subr.bf16.mxu0 0
      %452 = vmatpush1.bf16.msra.mxu0 0
      %453 = vmatprep.subr.bf16.mxu0 0
      %454 = vmatpush1.bf16.msra.mxu0 0
      %455 = vmatprep.subr.bf16.mxu0 0
      %456 = vmatpush1.bf16.msra.mxu0 %v391
      %457 = vmatprep.subr.bf16.mxu0 0
      %458 = vmatpush1.bf16.msra.mxu0 %v390
      %459 = vmatprep.subr.bf16.mxu0 0
      %460 = vmatpush2.bf16.msra.mxu0 0
      %461 = vmatprep.subr.bf16.mxu0 0
      %462 = vmatpush2.bf16.msra.mxu0 0
      %463 = vmatprep.subr.bf16.mxu0 0
      %464 = vmatpush2.bf16.msra.mxu0 0
      %465 = vmatprep.subr.bf16.mxu0 0
      %466 = vmatpush2.bf16.msra.mxu0 0
      %467 = vmatprep.subr.bf16.mxu0 0
      %468 = vmatpush2.bf16.msra.mxu0 0
      %469 = vmatprep.subr.bf16.mxu0 0
      %470 = vmatpush2.bf16.msra.mxu0 0
      %471 = vmatprep.subr.bf16.mxu0 0
      %472 = vmatpush2.bf16.msra.mxu0 0
      %473 = vmatprep.subr.bf16.mxu0 0
      %474 = vmatpush2.bf16.msra.mxu0 0
      %475 = vmatprep.mubr.bf16.mxu0 0
      %476 = vmatmul.mubr.bf16.gmra.mxu0 %v396
      %v477 = vpop.f32.mrf.mxu0
      %v478 = vadd.f32 0.0, %v477
      %v479 = vpop.f32.mrf.mxu0
      %v480 = vpop.f32.mrf.mxu0
      %v481 = vadd.f32 0.0, %v480
      %v482 = vpop.f32.mrf.mxu0
      %483 = vmatprep.mubr.bf16.mxu0 0
      %484 = vmatmul.mubr.bf16.gmra.mxu0 %v399
      %v485 = vpop.f32.mrf.mxu0
      %v486 = vadd.f32 0.0, %v485
      %v487 = vpop.f32.mrf.mxu0
      %v488 = vpop.f32.mrf.mxu0
      %v489 = vadd.f32 0.0, %v488
      %v490 = vpop.f32.mrf.mxu0
      %491 = vmatprep.mubr.bf16.mxu0 0
      %492 = vmatmul.mubr.bf16.gmra.mxu0 %v402
      %v493 = vpop.f32.mrf.mxu0
      %v494 = vadd.f32 0.0, %v493
      %v495 = vpop.f32.mrf.mxu0
      %v496 = vpop.f32.mrf.mxu0
      %v497 = vadd.f32 0.0, %v496
      %v498 = vpop.f32.mrf.mxu0
      %499 = vmatprep.mubr.bf16.mxu0 0
      %500 = vmatmul.mubr.bf16.gmra.mxu0 %v405
      %v501 = vpop.f32.mrf.mxu0
      %v502 = vadd.f32 0.0, %v501
      %v503 = vpop.f32.mrf.mxu0
      %v504 = vpop.f32.mrf.mxu0
      %v505 = vadd.f32 0.0, %v504
      %v506 = vpop.f32.mrf.mxu0
      %507 = vmatprep.mubr.bf16.mxu0 0
      %508 = vmatmul.mubr.bf16.gmra.mxu0 %v408
      %v509 = vpop.f32.mrf.mxu0
      %v510 = vadd.f32 0.0, %v509
      %v511 = vpop.f32.mrf.mxu0
      %v512 = vpop.f32.mrf.mxu0
      %v513 = vadd.f32 0.0, %v512
      %v514 = vpop.f32.mrf.mxu0
      %515 = vmatprep.mubr.bf16.mxu0 0
      %516 = vmatmul.mubr.bf16.gmra.mxu0 %v411
      %v517 = vpop.f32.mrf.mxu0
      %v518 = vadd.f32 0.0, %v517
      %v519 = vpop.f32.mrf.mxu0
      %v520 = vpop.f32.mrf.mxu0
      %v521 = vadd.f32 0.0, %v520
      %v522 = vpop.f32.mrf.mxu0
      %523 = vmatprep.mubr.bf16.mxu0 0
      %524 = vmatmul.mubr.bf16.gmra.mxu0 %v414
      %v525 = vpop.f32.mrf.mxu0
      %v526 = vadd.f32 0.0, %v525
      %v527 = vpop.f32.mrf.mxu0
      %v528 = vpop.f32.mrf.mxu0
      %v529 = vadd.f32 0.0, %v528
      %v530 = vpop.f32.mrf.mxu0
      %531 = vmatprep.mubr.bf16.mxu0 0
      %532 = vmatmul.mubr.bf16.gmra.mxu0 %v417
      %v533 = vpop.f32.mrf.mxu0
      %v534 = vadd.f32 0.0, %v533
      %v535 = vpop.f32.mrf.mxu0
      %v536 = vpop.f32.mrf.mxu0
      %v537 = vadd.f32 0.0, %v536
      %v538 = vpop.f32.mrf.mxu0
      %539 = vmatprep.mubr.bf16.mxu0 0
      %540 = vmatmul.mubr.bf16.gmra.mxu0 %v420
      %v541 = vpop.f32.mrf.mxu0
      %v542 = vadd.f32 0.0, %v541
      %v543 = vpop.f32.mrf.mxu0
      %v544 = vpop.f32.mrf.mxu0
      %v545 = vadd.f32 0.0, %v544
      %v546 = vpop.f32.mrf.mxu0
      %547 = vmatprep.mubr.bf16.mxu0 0
      %548 = vmatmul.mubr.bf16.gmra.mxu0 %v423
      %v549 = vpop.f32.mrf.mxu0
      %v550 = vadd.f32 0.0, %v549
      %v551 = vpop.f32.mrf.mxu0
      %v552 = vpop.f32.mrf.mxu0
      %v553 = vadd.f32 0.0, %v552
      %v554 = vpop.f32.mrf.mxu0
      %555 = vmatprep.mubr.bf16.mxu0 0
      %556 = vmatmul.mubr.bf16.gmra.mxu0 %v426
      %v557 = vpop.f32.mrf.mxu0
      %v558 = vadd.f32 0.0, %v557
      %v559 = vpop.f32.mrf.mxu0
      %v560 = vpop.f32.mrf.mxu0
      %v561 = vadd.f32 0.0, %v560
      %v562 = vpop.f32.mrf.mxu0
      %563 = vmatprep.mubr.bf16.mxu0 0
      %564 = vmatmul.mubr.bf16.gmra.mxu0 %v429
      %v565 = vpop.f32.mrf.mxu0
      %v566 = vadd.f32 0.0, %v565
      %v567 = vpop.f32.mrf.mxu0
      %v568 = vpop.f32.mrf.mxu0
      %v569 = vadd.f32 0.0, %v568
      %v570 = vpop.f32.mrf.mxu0
      %571 = vmatprep.mubr.bf16.mxu0 0
      %572 = vmatmul.mubr.bf16.gmra.mxu0 %v432
      %v573 = vpop.f32.mrf.mxu0
      %v574 = vadd.f32 0.0, %v573
      %v575 = vpop.f32.mrf.mxu0
      %v576 = vpop.f32.mrf.mxu0
      %v577 = vadd.f32 0.0, %v576
      %v578 = vpop.f32.mrf.mxu0
      %579 = vmatprep.mubr.bf16.mxu0 0
      %580 = vmatmul.mubr.bf16.gmra.mxu0 %v435
      %v581 = vpop.f32.mrf.mxu0
      %v582 = vadd.f32 0.0, %v581
      %v583 = vpop.f32.mrf.mxu0
      %v584 = vpop.f32.mrf.mxu0
      %v585 = vadd.f32 0.0, %v584
      %v586 = vpop.f32.mrf.mxu0
      %587 = vmatprep.mubr.bf16.mxu0 0
      %588 = vmatmul.mubr.bf16.gmra.mxu0 %v438
      %v589 = vpop.f32.mrf.mxu0
      %v590 = vadd.f32 0.0, %v589
      %v591 = vpop.f32.mrf.mxu0
      %v592 = vpop.f32.mrf.mxu0
      %v593 = vadd.f32 0.0, %v592
      %v594 = vpop.f32.mrf.mxu0
      %595 = vmatprep.mubr.bf16.mxu0 0
      %596 = vmatmul.mubr.bf16.gmra.mxu0 %v441
      %v597 = vpop.f32.mrf.mxu0
      %v598 = vadd.f32 0.0, %v597
      %v599 = vpop.f32.mrf.mxu0
      %v600 = vpop.f32.mrf.mxu0
      %v601 = vadd.f32 0.0, %v600
      %v602 = vpop.f32.mrf.mxu0
      %603 = vdwg.mxu0
      %p604 = scmp.eq.s32.totalorder %s21, 0
      %p605 = scmp.eq.s32.totalorder %s22, 0
      %p606 = pnand %p604, %p605
      %p607 = pneg %p606
      // Predicated region
      $region45: #{resnet_ltg_forward.1} parent=43 // pred_check
        _
      $region46: #{resnet_ltg_forward.1} parent=43 // pred_check_branch
        %609 = sbr.rel (%p606) target = $region48
      $region47: #{resnet_ltg_forward.1} parent=43 // pred_region
        %vm610 = vcmask 516096
        %611 = vst.msk [vmem:[#allocation2] sm:$0x1] %vm610, 0.0
        %612 = vst.msk [vmem:[#allocation3] sm:$0x1] %vm610, 0.0
      $region48: #{resnet_ltg_forward.1} parent=43 // pred_fallthru
        _
      // Predicated region
      $region49: #{resnet_ltg_forward.1} parent=43 // pred_check
        %p613 = pneg %p604
      $region50: #{resnet_ltg_forward.1} parent=43 // pred_check_branch
        %615 = sbr.rel (%p613) target = $region52
      $region51: #{resnet_ltg_forward.1} parent=43 // pred_region
        %v616 = vld [vmem:[#allocation2] sm:$0x1]
        %vm617 = vcmask 523264
        %v618 = vsel %vm617, %v478, 0.0
        %v619 = vsel %vm617, %v481, 0.0
        %v620 = vadd.f32 %v618, %v619
        %v621 = vsel %vm617, %v486, 0.0
        %v622 = vadd.f32 %v620, %v621
        %v623 = vsel %vm617, %v489, 0.0
        %v624 = vadd.f32 %v622, %v623
        %v625 = vsel %vm617, %v494, 0.0
        %v626 = vadd.f32 %v624, %v625
        %v627 = vsel %vm617, %v497, 0.0
        %v628 = vadd.f32 %v626, %v627
        %v629 = vsel %vm617, %v502, 0.0
        %v630 = vadd.f32 %v628, %v629
        %v631 = vsel %vm617, %v505, 0.0
        %v632 = vadd.f32 %v630, %v631
        %v633 = vsel %vm617, %v510, 0.0
        %v634 = vadd.f32 %v632, %v633
        %v635 = vsel %vm617, %v513, 0.0
        %v636 = vadd.f32 %v634, %v635
        %v637 = vsel %vm617, %v518, 0.0
        %v638 = vadd.f32 %v636, %v637
        %v639 = vsel %vm617, %v521, 0.0
        %v640 = vadd.f32 %v638, %v639
        %v641 = vsel %vm617, %v526, 0.0
        %v642 = vadd.f32 %v640, %v641
        %v643 = vsel %vm617, %v529, 0.0
        %v644 = vadd.f32 %v642, %v643
        %v645 = vsel %vm617, %v534, 0.0
        %v646 = vadd.f32 %v644, %v645
        %v647 = vsel %vm617, %v537, 0.0
        %v648 = vadd.f32 %v646, %v647
        %v649 = vsel %vm617, %v542, 0.0
        %v650 = vadd.f32 %v648, %v649
        %v651 = vsel %vm617, %v545, 0.0
        %v652 = vadd.f32 %v650, %v651
        %v653 = vsel %vm617, %v550, 0.0
        %v654 = vadd.f32 %v652, %v653
        %v655 = vsel %vm617, %v553, 0.0
        %v656 = vadd.f32 %v654, %v655
        %v657 = vsel %vm617, %v558, 0.0
        %v658 = vadd.f32 %v656, %v657
        %v659 = vsel %vm617, %v561, 0.0
        %v660 = vadd.f32 %v658, %v659
        %v661 = vsel %vm617, %v566, 0.0
        %v662 = vadd.f32 %v660, %v661
        %v663 = vsel %vm617, %v569, 0.0
        %v664 = vadd.f32 %v662, %v663
        %v665 = vsel %vm617, %v574, 0.0
        %v666 = vadd.f32 %v664, %v665
        %v667 = vsel %vm617, %v577, 0.0
        %v668 = vadd.f32 %v666, %v667
        %v669 = vsel %vm617, %v582, 0.0
        %v670 = vadd.f32 %v668, %v669
        %v671 = vsel %vm617, %v585, 0.0
        %v672 = vadd.f32 %v670, %v671
        %v673 = vsel %vm617, %v590, 0.0
        %v674 = vadd.f32 %v672, %v673
        %v675 = vsel %vm617, %v593, 0.0
        %v676 = vadd.f32 %v674, %v675
        %v677 = vsel %vm617, %v598, 0.0
        %v678 = vadd.f32 %v676, %v677
        %v679 = vsel %vm617, %v601, 0.0
        %v680 = vadd.f32 %v678, %v679
        %v681 = vrot.slane %v680, 4
        %v682 = vadd.f32 %v680, %v681
        %v683 = vrot.slane %v682, 2
        %v684 = vadd.f32 %v682, %v683
        %v685 = vrot.slane %v684, 1
        %v686 = vadd.f32 %v684, %v685
        %v687 = vadd.f32 %v616, %v686
        %vm688 = vcmask 516096
        %689 = vst.msk [vmem:[#allocation2] sm:$0x1] %vm688, %v687
        %v690 = vld [vmem:[#allocation3] sm:$0x1]
        %v691 = vmul.f32 %v478, %v478
        %v692 = vmul.f32 %v481, %v481
        %v693 = vmul.f32 %v486, %v486
        %v694 = vmul.f32 %v489, %v489
        %v695 = vmul.f32 %v494, %v494
        %v696 = vmul.f32 %v497, %v497
        %v697 = vmul.f32 %v502, %v502
        %v698 = vmul.f32 %v505, %v505
        %v699 = vmul.f32 %v510, %v510
        %v700 = vmul.f32 %v513, %v513
        %v701 = vmul.f32 %v518, %v518
        %v702 = vmul.f32 %v521, %v521
        %v703 = vmul.f32 %v526, %v526
        %v704 = vmul.f32 %v529, %v529
        %v705 = vmul.f32 %v534, %v534
        %v706 = vmul.f32 %v537, %v537
        %v707 = vmul.f32 %v542, %v542
        %v708 = vmul.f32 %v545, %v545
        %v709 = vmul.f32 %v550, %v550
        %v710 = vmul.f32 %v553, %v553
        %v711 = vmul.f32 %v558, %v558
        %v712 = vmul.f32 %v561, %v561
        %v713 = vmul.f32 %v566, %v566
        %v714 = vmul.f32 %v569, %v569
        %v715 = vmul.f32 %v574, %v574
        %v716 = vmul.f32 %v577, %v577
        %v717 = vmul.f32 %v582, %v582
        %v718 = vmul.f32 %v585, %v585
        %v719 = vmul.f32 %v590, %v590
        %v720 = vmul.f32 %v593, %v593
        %v721 = vmul.f32 %v598, %v598
        %v722 = vmul.f32 %v601, %v601
        %v723 = vsel %vm617, %v691, 0.0
        %v724 = vsel %vm617, %v692, 0.0
        %v725 = vadd.f32 %v723, %v724
        %v726 = vsel %vm617, %v693, 0.0
        %v727 = vadd.f32 %v725, %v726
        %v728 = vsel %vm617, %v694, 0.0
        %v729 = vadd.f32 %v727, %v728
        %v730 = vsel %vm617, %v695, 0.0
        %v731 = vadd.f32 %v729, %v730
        %v732 = vsel %vm617, %v696, 0.0
        %v733 = vadd.f32 %v731, %v732
        %v734 = vsel %vm617, %v697, 0.0
        %v735 = vadd.f32 %v733, %v734
        %v736 = vsel %vm617, %v698, 0.0
        %v737 = vadd.f32 %v735, %v736
        %v738 = vsel %vm617, %v699, 0.0
        %v739 = vadd.f32 %v737, %v738
        %v740 = vsel %vm617, %v700, 0.0
        %v741 = vadd.f32 %v739, %v740
        %v742 = vsel %vm617, %v701, 0.0
        %v743 = vadd.f32 %v741, %v742
        %v744 = vsel %vm617, %v702, 0.0
        %v745 = vadd.f32 %v743, %v744
        %v746 = vsel %vm617, %v703, 0.0
        %v747 = vadd.f32 %v745, %v746
        %v748 = vsel %vm617, %v704, 0.0
        %v749 = vadd.f32 %v747, %v748
        %v750 = vsel %vm617, %v705, 0.0
        %v751 = vadd.f32 %v749, %v750
        %v752 = vsel %vm617, %v706, 0.0
        %v753 = vadd.f32 %v751, %v752
        %v754 = vsel %vm617, %v707, 0.0
        %v755 = vadd.f32 %v753, %v754
        %v756 = vsel %vm617, %v708, 0.0
        %v757 = vadd.f32 %v755, %v756
        %v758 = vsel %vm617, %v709, 0.0
        %v759 = vadd.f32 %v757, %v758
        %v760 = vsel %vm617, %v710, 0.0
        %v761 = vadd.f32 %v759, %v760
        %v762 = vsel %vm617, %v711, 0.0
        %v763 = vadd.f32 %v761, %v762
        %v764 = vsel %vm617, %v712, 0.0
        %v765 = vadd.f32 %v763, %v764
        %v766 = vsel %vm617, %v713, 0.0
        %v767 = vadd.f32 %v765, %v766
        %v768 = vsel %vm617, %v714, 0.0
        %v769 = vadd.f32 %v767, %v768
        %v770 = vsel %vm617, %v715, 0.0
        %v771 = vadd.f32 %v769, %v770
        %v772 = vsel %vm617, %v716, 0.0
        %v773 = vadd.f32 %v771, %v772
        %v774 = vsel %vm617, %v717, 0.0
        %v775 = vadd.f32 %v773, %v774
        %v776 = vsel %vm617, %v718, 0.0
        %v777 = vadd.f32 %v775, %v776
        %v778 = vsel %vm617, %v719, 0.0
        %v779 = vadd.f32 %v777, %v778
        %v780 = vsel %vm617, %v720, 0.0
        %v781 = vadd.f32 %v779, %v780
        %v782 = vsel %vm617, %v721, 0.0
        %v783 = vadd.f32 %v781, %v782
        %v784 = vsel %vm617, %v722, 0.0
        %v785 = vadd.f32 %v783, %v784
        %v786 = vrot.slane %v785, 4
        %v787 = vadd.f32 %v785, %v786
        %v788 = vrot.slane %v787, 2
        %v789 = vadd.f32 %v787, %v788
        %v790 = vrot.slane %v789, 1
        %v791 = vadd.f32 %v789, %v790
        %v792 = vadd.f32 %v690, %v791
        %793 = vst.msk [vmem:[#allocation3] sm:$0x1] %vm688, %v792
      $region52: #{resnet_ltg_forward.1} parent=43 // pred_fallthru
        _
      %p794 = scmp.eq.s32.totalorder %s21, 1
      // Predicated region
      $region53: #{resnet_ltg_forward.1} parent=43 // pred_check
        %p795 = pneg %p794
      $region54: #{resnet_ltg_forward.1} parent=43 // pred_check_branch
        %797 = sbr.rel (%p795) target = $region56
      $region55: #{resnet_ltg_forward.1} parent=43 // pred_region
        %v798 = vld [vmem:[#allocation2] sm:$0x1]
        %v799 = vmul.f32 %v798, 0.001953125
        %v800 = vld [vmem:[#allocation3] sm:$0x1]
        %v801 = vmul.f32 %v800, 0.001953125
        %v802 = vmul.f32 %v799, %v799
        %v803 = vsub.f32 %v801, %v802
        %v804 = vmax.f32 %v803, 0.0
        %v805 = vld [vmem:[%s2] sm:$0x1]
        %v806 = vadd.f32 %v804, 1e-05
        %v807 = vrsqrt.pop %v806
        %v808 = vmul.f32 %v805, %v807
        %v809 = vld [vmem:[%s3] sm:$0x1]
        %v810 = vmul.f32 %v799, %v808
        %v811 = vsub.f32 %v809, %v810
        %v813 = vlaneseq
        %v814 = vshrl.u32 %v813, 7
        %v815 = vsub.s32 0, %v814
        %v816 = vrot.slane %v808, %v815
        %v818 = vmul.f32 %v478, %v816
        %v819 = vmul.f32 %v481, %v816
        %v820 = vmul.f32 %v486, %v816
        %v821 = vmul.f32 %v489, %v816
        %v822 = vmul.f32 %v494, %v816
        %v823 = vmul.f32 %v497, %v816
        %v824 = vmul.f32 %v502, %v816
        %v825 = vmul.f32 %v505, %v816
        %v826 = vmul.f32 %v510, %v816
        %v827 = vmul.f32 %v513, %v816
        %v828 = vmul.f32 %v518, %v816
        %v829 = vmul.f32 %v521, %v816
        %v830 = vmul.f32 %v526, %v816
        %v831 = vmul.f32 %v529, %v816
        %v832 = vmul.f32 %v534, %v816
        %v833 = vmul.f32 %v537, %v816
        %v834 = vmul.f32 %v542, %v816
        %v835 = vmul.f32 %v545, %v816
        %v836 = vmul.f32 %v550, %v816
        %v837 = vmul.f32 %v553, %v816
        %v838 = vmul.f32 %v558, %v816
        %v839 = vmul.f32 %v561, %v816
        %v840 = vmul.f32 %v566, %v816
        %v841 = vmul.f32 %v569, %v816
        %v842 = vmul.f32 %v574, %v816
        %v843 = vmul.f32 %v577, %v816
        %v844 = vmul.f32 %v582, %v816
        %v845 = vmul.f32 %v585, %v816
        %v846 = vmul.f32 %v590, %v816
        %v847 = vmul.f32 %v593, %v816
        %v848 = vmul.f32 %v598, %v816
        %v849 = vmul.f32 %v601, %v816
        %v851 = vlaneseq
        %v852 = vshrl.u32 %v851, 7
        %v853 = vsub.s32 0, %v852
        %v854 = vrot.slane %v811, %v853
        %v856 = vadd.f32 %v818, %v854
        %v857 = vadd.f32 %v819, %v854
        %v858 = vadd.f32 %v820, %v854
        %v859 = vadd.f32 %v821, %v854
        %v860 = vadd.f32 %v822, %v854
        %v861 = vadd.f32 %v823, %v854
        %v862 = vadd.f32 %v824, %v854
        %v863 = vadd.f32 %v825, %v854
        %v864 = vadd.f32 %v826, %v854
        %v865 = vadd.f32 %v827, %v854
        %v866 = vadd.f32 %v828, %v854
        %v867 = vadd.f32 %v829, %v854
        %v868 = vadd.f32 %v830, %v854
        %v869 = vadd.f32 %v831, %v854
        %v870 = vadd.f32 %v832, %v854
        %v871 = vadd.f32 %v833, %v854
        %v872 = vadd.f32 %v834, %v854
        %v873 = vadd.f32 %v835, %v854
        %v874 = vadd.f32 %v836, %v854
        %v875 = vadd.f32 %v837, %v854
        %v876 = vadd.f32 %v838, %v854
        %v877 = vadd.f32 %v839, %v854
        %v878 = vadd.f32 %v840, %v854
        %v879 = vadd.f32 %v841, %v854
        %v880 = vadd.f32 %v842, %v854
        %v881 = vadd.f32 %v843, %v854
        %v882 = vadd.f32 %v844, %v854
        %v883 = vadd.f32 %v845, %v854
        %v884 = vadd.f32 %v846, %v854
        %v885 = vadd.f32 %v847, %v854
        %v886 = vadd.f32 %v848, %v854
        %v887 = vadd.f32 %v849, %v854
        %v888 = vmax.f32 %v856, 0.0
        %v889 = vmax.f32 %v857, 0.0
        %v890 = vmax.f32 %v858, 0.0
        %v891 = vmax.f32 %v859, 0.0
        %v892 = vmax.f32 %v860, 0.0
        %v893 = vmax.f32 %v861, 0.0
        %v894 = vmax.f32 %v862, 0.0
        %v895 = vmax.f32 %v863, 0.0
        %v896 = vmax.f32 %v864, 0.0
        %v897 = vmax.f32 %v865, 0.0
        %v898 = vmax.f32 %v866, 0.0
        %v899 = vmax.f32 %v867, 0.0
        %v900 = vmax.f32 %v868, 0.0
        %v901 = vmax.f32 %v869, 0.0
        %v902 = vmax.f32 %v870, 0.0
        %v903 = vmax.f32 %v871, 0.0
        %v904 = vmax.f32 %v872, 0.0
        %v905 = vmax.f32 %v873, 0.0
        %v906 = vmax.f32 %v874, 0.0
        %v907 = vmax.f32 %v875, 0.0
        %v908 = vmax.f32 %v876, 0.0
        %v909 = vmax.f32 %v877, 0.0
        %v910 = vmax.f32 %v878, 0.0
        %v911 = vmax.f32 %v879, 0.0
        %v912 = vmax.f32 %v880, 0.0
        %v913 = vmax.f32 %v881, 0.0
        %v914 = vmax.f32 %v882, 0.0
        %v915 = vmax.f32 %v883, 0.0
        %v916 = vmax.f32 %v884, 0.0
        %v917 = vmax.f32 %v885, 0.0
        %v918 = vmax.f32 %v886, 0.0
        %v919 = vmax.f32 %v887, 0.0
        %v920 = vmax.f32 %v888, %v890
        %v921 = vmax.f32 %v889, %v891
        %v922 = vmax.f32 %v892, %v894
        %v923 = vmax.f32 %v893, %v895
        %v924 = vmax.f32 %v896, %v898
        %v925 = vmax.f32 %v897, %v899
        %v926 = vmax.f32 %v900, %v902
        %v927 = vmax.f32 %v901, %v903
        %v928 = vmax.f32 %v904, %v906
        %v929 = vmax.f32 %v905, %v907
        %v930 = vmax.f32 %v908, %v910
        %v931 = vmax.f32 %v909, %v911
        %v932 = vmax.f32 %v912, %v914
        %v933 = vmax.f32 %v913, %v915
        %v934 = vmax.f32 %v916, %v918
        %v935 = vmax.f32 %v917, %v919
        %v936 = vmax.f32 %v922, %v890
        %v937 = vmax.f32 %v923, %v891
        %v938 = vmax.f32 %v924, %v894
        %v939 = vmax.f32 %v925, %v895
        %v940 = vmax.f32 %v926, %v898
        %v941 = vmax.f32 %v927, %v899
        %v942 = vmax.f32 %v928, %v902
        %v943 = vmax.f32 %v929, %v903
        %v944 = vmax.f32 %v930, %v906
        %v945 = vmax.f32 %v931, %v907
        %v946 = vmax.f32 %v932, %v910
        %v947 = vmax.f32 %v933, %v911
        %v948 = vmax.f32 %v934, %v914
        %v949 = vmax.f32 %v935, %v915
        %v966 = vcombine.high %v920, %v920
        %v968 = vunpack.c.l.s4 1983009808
        %v969 = vunpack.c.0.s8 %v968
        %v970 = vlaneseq
        %v971 = vshrl.u32 %v970, 7
        %v972 = vsub.s32 %v969, %v971
        %v973 = vrot.slane %v920, %v972
        %v975 = vunpack.c.l.s4 1983009808
        %v976 = vunpack.c.0.s8 %v975
        %v977 = vlaneseq
        %v978 = vshrl.u32 %v977, 7
        %v979 = vsub.s32 %v976, %v978
        %v980 = vrot.slane %v966, %v979
        %v981 = vcombine.high %v973, %v973
        %v982 = vcombine.high %v980, %v980
        %v983 = vcombine.high %v921, %v921
        %v985 = vunpack.c.l.s4 1983009808
        %v986 = vunpack.c.0.s8 %v985
        %v987 = vlaneseq
        %v988 = vshrl.u32 %v987, 7
        %v989 = vsub.s32 %v986, %v988
        %v990 = vrot.slane %v921, %v989
        %v992 = vunpack.c.l.s4 1983009808
        %v993 = vunpack.c.0.s8 %v992
        %v994 = vlaneseq
        %v995 = vshrl.u32 %v994, 7
        %v996 = vsub.s32 %v993, %v995
        %v997 = vrot.slane %v983, %v996
        %v998 = vcombine.high %v990, %v990
        %v999 = vcombine.high %v997, %v997
        %v1000 = vcombine.high %v936, %v936
        %v1002 = vunpack.c.l.s4 1983009808
        %v1003 = vunpack.c.0.s8 %v1002
        %v1004 = vlaneseq
        %v1005 = vshrl.u32 %v1004, 7
        %v1006 = vsub.s32 %v1003, %v1005
        %v1007 = vrot.slane %v936, %v1006
        %v1009 = vunpack.c.l.s4 1983009808
        %v1010 = vunpack.c.0.s8 %v1009
        %v1011 = vlaneseq
        %v1012 = vshrl.u32 %v1011, 7
        %v1013 = vsub.s32 %v1010, %v1012
        %v1014 = vrot.slane %v1000, %v1013
        %v1015 = vcombine.high %v1007, %v1007
        %v1016 = vcombine.high %v1014, %v1014
        %v1017 = vcombine.high %v937, %v937
        %v1019 = vunpack.c.l.s4 1983009808
        %v1020 = vunpack.c.0.s8 %v1019
        %v1021 = vlaneseq
        %v1022 = vshrl.u32 %v1021, 7
        %v1023 = vsub.s32 %v1020, %v1022
        %v1024 = vrot.slane %v937, %v1023
        %v1026 = vunpack.c.l.s4 1983009808
        %v1027 = vunpack.c.0.s8 %v1026
        %v1028 = vlaneseq
        %v1029 = vshrl.u32 %v1028, 7
        %v1030 = vsub.s32 %v1027, %v1029
        %v1031 = vrot.slane %v1017, %v1030
        %v1032 = vcombine.high %v1024, %v1024
        %v1033 = vcombine.high %v1031, %v1031
        %v1034 = vcombine.high %v938, %v938
        %v1036 = vunpack.c.l.s4 1983009808
        %v1037 = vunpack.c.0.s8 %v1036
        %v1038 = vlaneseq
        %v1039 = vshrl.u32 %v1038, 7
        %v1040 = vsub.s32 %v1037, %v1039
        %v1041 = vrot.slane %v938, %v1040
        %v1043 = vunpack.c.l.s4 1983009808
        %v1044 = vunpack.c.0.s8 %v1043
        %v1045 = vlaneseq
        %v1046 = vshrl.u32 %v1045, 7
        %v1047 = vsub.s32 %v1044, %v1046
        %v1048 = vrot.slane %v1034, %v1047
        %v1049 = vcombine.high %v1041, %v1041
        %v1050 = vcombine.high %v1048, %v1048
        %v1051 = vcombine.high %v939, %v939
        %v1053 = vunpack.c.l.s4 1983009808
        %v1054 = vunpack.c.0.s8 %v1053
        %v1055 = vlaneseq
        %v1056 = vshrl.u32 %v1055, 7
        %v1057 = vsub.s32 %v1054, %v1056
        %v1058 = vrot.slane %v939, %v1057
        %v1060 = vunpack.c.l.s4 1983009808
        %v1061 = vunpack.c.0.s8 %v1060
        %v1062 = vlaneseq
        %v1063 = vshrl.u32 %v1062, 7
        %v1064 = vsub.s32 %v1061, %v1063
        %v1065 = vrot.slane %v1051, %v1064
        %v1066 = vcombine.high %v1058, %v1058
        %v1067 = vcombine.high %v1065, %v1065
        %v1068 = vcombine.high %v940, %v940
        %v1070 = vunpack.c.l.s4 1983009808
        %v1071 = vunpack.c.0.s8 %v1070
        %v1072 = vlaneseq
        %v1073 = vshrl.u32 %v1072, 7
        %v1074 = vsub.s32 %v1071, %v1073
        %v1075 = vrot.slane %v940, %v1074
        %v1077 = vunpack.c.l.s4 1983009808
        %v1078 = vunpack.c.0.s8 %v1077
        %v1079 = vlaneseq
        %v1080 = vshrl.u32 %v1079, 7
        %v1081 = vsub.s32 %v1078, %v1080
        %v1082 = vrot.slane %v1068, %v1081
        %v1083 = vcombine.high %v1075, %v1075
        %v1084 = vcombine.high %v1082, %v1082
        %v1085 = vcombine.high %v941, %v941
        %v1087 = vunpack.c.l.s4 1983009808
        %v1088 = vunpack.c.0.s8 %v1087
        %v1089 = vlaneseq
        %v1090 = vshrl.u32 %v1089, 7
        %v1091 = vsub.s32 %v1088, %v1090
        %v1092 = vrot.slane %v941, %v1091
        %v1094 = vunpack.c.l.s4 1983009808
        %v1095 = vunpack.c.0.s8 %v1094
        %v1096 = vlaneseq
        %v1097 = vshrl.u32 %v1096, 7
        %v1098 = vsub.s32 %v1095, %v1097
        %v1099 = vrot.slane %v1085, %v1098
        %v1100 = vcombine.high %v1092, %v1092
        %v1101 = vcombine.high %v1099, %v1099
        %v1102 = vcombine.high %v942, %v942
        %v1104 = vunpack.c.l.s4 1983009808
        %v1105 = vunpack.c.0.s8 %v1104
        %v1106 = vlaneseq
        %v1107 = vshrl.u32 %v1106, 7
        %v1108 = vsub.s32 %v1105, %v1107
        %v1109 = vrot.slane %v942, %v1108
        %v1111 = vunpack.c.l.s4 1983009808
        %v1112 = vunpack.c.0.s8 %v1111
        %v1113 = vlaneseq
        %v1114 = vshrl.u32 %v1113, 7
        %v1115 = vsub.s32 %v1112, %v1114
        %v1116 = vrot.slane %v1102, %v1115
        %v1117 = vcombine.high %v1109, %v1109
        %v1118 = vcombine.high %v1116, %v1116
        %v1119 = vcombine.high %v943, %v943
        %v1121 = vunpack.c.l.s4 1983009808
        %v1122 = vunpack.c.0.s8 %v1121
        %v1123 = vlaneseq
        %v1124 = vshrl.u32 %v1123, 7
        %v1125 = vsub.s32 %v1122, %v1124
        %v1126 = vrot.slane %v943, %v1125
        %v1128 = vunpack.c.l.s4 1983009808
        %v1129 = vunpack.c.0.s8 %v1128
        %v1130 = vlaneseq
        %v1131 = vshrl.u32 %v1130, 7
        %v1132 = vsub.s32 %v1129, %v1131
        %v1133 = vrot.slane %v1119, %v1132
        %v1134 = vcombine.high %v1126, %v1126
        %v1135 = vcombine.high %v1133, %v1133
        %v1136 = vcombine.high %v944, %v944
        %v1138 = vunpack.c.l.s4 1983009808
        %v1139 = vunpack.c.0.s8 %v1138
        %v1140 = vlaneseq
        %v1141 = vshrl.u32 %v1140, 7
        %v1142 = vsub.s32 %v1139, %v1141
        %v1143 = vrot.slane %v944, %v1142
        %v1145 = vunpack.c.l.s4 1983009808
        %v1146 = vunpack.c.0.s8 %v1145
        %v1147 = vlaneseq
        %v1148 = vshrl.u32 %v1147, 7
        %v1149 = vsub.s32 %v1146, %v1148
        %v1150 = vrot.slane %v1136, %v1149
        %v1151 = vcombine.high %v1143, %v1143
        %v1152 = vcombine.high %v1150, %v1150
        %v1153 = vcombine.high %v945, %v945
        %v1155 = vunpack.c.l.s4 1983009808
        %v1156 = vunpack.c.0.s8 %v1155
        %v1157 = vlaneseq
        %v1158 = vshrl.u32 %v1157, 7
        %v1159 = vsub.s32 %v1156, %v1158
        %v1160 = vrot.slane %v945, %v1159
        %v1162 = vunpack.c.l.s4 1983009808
        %v1163 = vunpack.c.0.s8 %v1162
        %v1164 = vlaneseq
        %v1165 = vshrl.u32 %v1164, 7
        %v1166 = vsub.s32 %v1163, %v1165
        %v1167 = vrot.slane %v1153, %v1166
        %v1168 = vcombine.high %v1160, %v1160
        %v1169 = vcombine.high %v1167, %v1167
        %v1170 = vcombine.high %v946, %v946
        %v1172 = vunpack.c.l.s4 1983009808
        %v1173 = vunpack.c.0.s8 %v1172
        %v1174 = vlaneseq
        %v1175 = vshrl.u32 %v1174, 7
        %v1176 = vsub.s32 %v1173, %v1175
        %v1177 = vrot.slane %v946, %v1176
        %v1179 = vunpack.c.l.s4 1983009808
        %v1180 = vunpack.c.0.s8 %v1179
        %v1181 = vlaneseq
        %v1182 = vshrl.u32 %v1181, 7
        %v1183 = vsub.s32 %v1180, %v1182
        %v1184 = vrot.slane %v1170, %v1183
        %v1185 = vcombine.high %v1177, %v1177
        %v1186 = vcombine.high %v1184, %v1184
        %v1187 = vcombine.high %v947, %v947
        %v1189 = vunpack.c.l.s4 1983009808
        %v1190 = vunpack.c.0.s8 %v1189
        %v1191 = vlaneseq
        %v1192 = vshrl.u32 %v1191, 7
        %v1193 = vsub.s32 %v1190, %v1192
        %v1194 = vrot.slane %v947, %v1193
        %v1196 = vunpack.c.l.s4 1983009808
        %v1197 = vunpack.c.0.s8 %v1196
        %v1198 = vlaneseq
        %v1199 = vshrl.u32 %v1198, 7
        %v1200 = vsub.s32 %v1197, %v1199
        %v1201 = vrot.slane %v1187, %v1200
        %v1202 = vcombine.high %v1194, %v1194
        %v1203 = vcombine.high %v1201, %v1201
        %v1204 = vcombine.high %v948, %v948
        %v1206 = vunpack.c.l.s4 1983009808
        %v1207 = vunpack.c.0.s8 %v1206
        %v1208 = vlaneseq
        %v1209 = vshrl.u32 %v1208, 7
        %v1210 = vsub.s32 %v1207, %v1209
        %v1211 = vrot.slane %v948, %v1210
        %v1213 = vunpack.c.l.s4 1983009808
        %v1214 = vunpack.c.0.s8 %v1213
        %v1215 = vlaneseq
        %v1216 = vshrl.u32 %v1215, 7
        %v1217 = vsub.s32 %v1214, %v1216
        %v1218 = vrot.slane %v1204, %v1217
        %v1219 = vcombine.high %v1211, %v1211
        %v1220 = vcombine.high %v1218, %v1218
        %v1221 = vcombine.high %v949, %v949
        %v1223 = vunpack.c.l.s4 1983009808
        %v1224 = vunpack.c.0.s8 %v1223
        %v1225 = vlaneseq
        %v1226 = vshrl.u32 %v1225, 7
        %v1227 = vsub.s32 %v1224, %v1226
        %v1228 = vrot.slane %v949, %v1227
        %v1230 = vunpack.c.l.s4 1983009808
        %v1231 = vunpack.c.0.s8 %v1230
        %v1232 = vlaneseq
        %v1233 = vshrl.u32 %v1232, 7
        %v1234 = vsub.s32 %v1231, %v1233
        %v1235 = vrot.slane %v1221, %v1234
        %v1236 = vcombine.high %v1228, %v1228
        %v1237 = vcombine.high %v1235, %v1235
        %v1302 = vrot.slane %v973, 7
        %v1303 = vrot.slane %v1302, 2
        %v1304 = vrot.slane %v981, 7
        %v1305 = vrot.slane %v1304, 2
        %v1306 = vrot.slane %v980, 7
        %v1307 = vrot.slane %v1306, 2
        %v1308 = vrot.slane %v982, 7
        %v1309 = vrot.slane %v1308, 2
        %v1310 = vrot.slane %v990, 7
        %v1311 = vrot.slane %v1310, 2
        %v1312 = vrot.slane %v998, 7
        %v1313 = vrot.slane %v1312, 2
        %v1314 = vrot.slane %v997, 7
        %v1315 = vrot.slane %v1314, 2
        %v1316 = vrot.slane %v999, 7
        %v1317 = vrot.slane %v1316, 2
        %v1318 = vrot.slane %v1007, 7
        %v1319 = vrot.slane %v1318, 2
        %v1320 = vrot.slane %v1015, 7
        %v1321 = vrot.slane %v1320, 2
        %v1322 = vrot.slane %v1014, 7
        %v1323 = vrot.slane %v1322, 2
        %v1324 = vrot.slane %v1016, 7
        %v1325 = vrot.slane %v1324, 2
        %v1326 = vrot.slane %v1024, 7
        %v1327 = vrot.slane %v1326, 2
        %v1328 = vrot.slane %v1032, 7
        %v1329 = vrot.slane %v1328, 2
        %v1330 = vrot.slane %v1031, 7
        %v1331 = vrot.slane %v1330, 2
        %v1332 = vrot.slane %v1033, 7
        %v1333 = vrot.slane %v1332, 2
        %v1334 = vrot.slane %v1041, 7
        %v1335 = vrot.slane %v1334, 2
        %v1336 = vrot.slane %v1049, 7
        %v1337 = vrot.slane %v1336, 2
        %v1338 = vrot.slane %v1048, 7
        %v1339 = vrot.slane %v1338, 2
        %v1340 = vrot.slane %v1050, 7
        %v1341 = vrot.slane %v1340, 2
        %v1342 = vrot.slane %v1058, 7
        %v1343 = vrot.slane %v1342, 2
        %v1344 = vrot.slane %v1066, 7
        %v1345 = vrot.slane %v1344, 2
        %v1346 = vrot.slane %v1065, 7
        %v1347 = vrot.slane %v1346, 2
        %v1348 = vrot.slane %v1067, 7
        %v1349 = vrot.slane %v1348, 2
        %v1350 = vrot.slane %v1075, 7
        %v1351 = vrot.slane %v1350, 2
        %v1352 = vrot.slane %v1083, 7
        %v1353 = vrot.slane %v1352, 2
        %v1354 = vrot.slane %v1082, 7
        %v1355 = vrot.slane %v1354, 2
        %v1356 = vrot.slane %v1084, 7
        %v1357 = vrot.slane %v1356, 2
        %v1358 = vrot.slane %v1092, 7
        %v1359 = vrot.slane %v1358, 2
        %v1360 = vrot.slane %v1100, 7
        %v1361 = vrot.slane %v1360, 2
        %v1362 = vrot.slane %v1099, 7
        %v1363 = vrot.slane %v1362, 2
        %v1364 = vrot.slane %v1101, 7
        %v1365 = vrot.slane %v1364, 2
        %v1366 = vrot.slane %v1109, 7
        %v1367 = vrot.slane %v1366, 2
        %v1368 = vrot.slane %v1117, 7
        %v1369 = vrot.slane %v1368, 2
        %v1370 = vrot.slane %v1116, 7
        %v1371 = vrot.slane %v1370, 2
        %v1372 = vrot.slane %v1118, 7
        %v1373 = vrot.slane %v1372, 2
        %v1374 = vrot.slane %v1126, 7
        %v1375 = vrot.slane %v1374, 2
        %v1376 = vrot.slane %v1134, 7
        %v1377 = vrot.slane %v1376, 2
        %v1378 = vrot.slane %v1133, 7
        %v1379 = vrot.slane %v1378, 2
        %v1380 = vrot.slane %v1135, 7
        %v1381 = vrot.slane %v1380, 2
        %v1382 = vrot.slane %v1143, 7
        %v1383 = vrot.slane %v1382, 2
        %v1384 = vrot.slane %v1151, 7
        %v1385 = vrot.slane %v1384, 2
        %v1386 = vrot.slane %v1150, 7
        %v1387 = vrot.slane %v1386, 2
        %v1388 = vrot.slane %v1152, 7
        %v1389 = vrot.slane %v1388, 2
        %v1390 = vrot.slane %v1160, 7
        %v1391 = vrot.slane %v1390, 2
        %v1392 = vrot.slane %v1168, 7
        %v1393 = vrot.slane %v1392, 2
        %v1394 = vrot.slane %v1167, 7
        %v1395 = vrot.slane %v1394, 2
        %v1396 = vrot.slane %v1169, 7
        %v1397 = vrot.slane %v1396, 2
        %v1398 = vrot.slane %v1177, 7
        %v1399 = vrot.slane %v1398, 2
        %v1400 = vrot.slane %v1185, 7
        %v1401 = vrot.slane %v1400, 2
        %v1402 = vrot.slane %v1184, 7
        %v1403 = vrot.slane %v1402, 2
        %v1404 = vrot.slane %v1186, 7
        %v1405 = vrot.slane %v1404, 2
        %v1406 = vrot.slane %v1194, 7
        %v1407 = vrot.slane %v1406, 2
        %v1408 = vrot.slane %v1202, 7
        %v1409 = vrot.slane %v1408, 2
        %v1410 = vrot.slane %v1201, 7
        %v1411 = vrot.slane %v1410, 2
        %v1412 = vrot.slane %v1203, 7
        %v1413 = vrot.slane %v1412, 2
        %v1414 = vrot.slane %v1211, 7
        %v1415 = vrot.slane %v1414, 2
        %v1416 = vrot.slane %v1219, 7
        %v1417 = vrot.slane %v1416, 2
        %v1418 = vrot.slane %v1218, 7
        %v1419 = vrot.slane %v1418, 2
        %v1420 = vrot.slane %v1220, 7
        %v1421 = vrot.slane %v1420, 2
        %v1422 = vrot.slane %v1228, 7
        %v1423 = vrot.slane %v1422, 2
        %v1424 = vrot.slane %v1236, 7
        %v1425 = vrot.slane %v1424, 2
        %v1426 = vrot.slane %v1235, 7
        %v1427 = vrot.slane %v1426, 2
        %v1428 = vrot.slane %v1237, 7
        %v1429 = vrot.slane %v1428, 2
        %v1494 = vmax.f32 %v973, %v1303
        %v1495 = vmax.f32 %v981, %v1305
        %v1496 = vmax.f32 %v980, %v1307
        %v1497 = vmax.f32 %v982, %v1309
        %v1498 = vmax.f32 %v990, %v1311
        %v1499 = vmax.f32 %v998, %v1313
        %v1500 = vmax.f32 %v997, %v1315
        %v1501 = vmax.f32 %v999, %v1317
        %v1502 = vmax.f32 %v1007, %v1319
        %v1503 = vmax.f32 %v1015, %v1321
        %v1504 = vmax.f32 %v1014, %v1323
        %v1505 = vmax.f32 %v1016, %v1325
        %v1506 = vmax.f32 %v1024, %v1327
        %v1507 = vmax.f32 %v1032, %v1329
        %v1508 = vmax.f32 %v1031, %v1331
        %v1509 = vmax.f32 %v1033, %v1333
        %v1510 = vmax.f32 %v1041, %v1335
        %v1511 = vmax.f32 %v1049, %v1337
        %v1512 = vmax.f32 %v1048, %v1339
        %v1513 = vmax.f32 %v1050, %v1341
        %v1514 = vmax.f32 %v1058, %v1343
        %v1515 = vmax.f32 %v1066, %v1345
        %v1516 = vmax.f32 %v1065, %v1347
        %v1517 = vmax.f32 %v1067, %v1349
        %v1518 = vmax.f32 %v1075, %v1351
        %v1519 = vmax.f32 %v1083, %v1353
        %v1520 = vmax.f32 %v1082, %v1355
        %v1521 = vmax.f32 %v1084, %v1357
        %v1522 = vmax.f32 %v1092, %v1359
        %v1523 = vmax.f32 %v1100, %v1361
        %v1524 = vmax.f32 %v1099, %v1363
        %v1525 = vmax.f32 %v1101, %v1365
        %v1526 = vmax.f32 %v1109, %v1367
        %v1527 = vmax.f32 %v1117, %v1369
        %v1528 = vmax.f32 %v1116, %v1371
        %v1529 = vmax.f32 %v1118, %v1373
        %v1530 = vmax.f32 %v1126, %v1375
        %v1531 = vmax.f32 %v1134, %v1377
        %v1532 = vmax.f32 %v1133, %v1379
        %v1533 = vmax.f32 %v1135, %v1381
        %v1534 = vmax.f32 %v1143, %v1383
        %v1535 = vmax.f32 %v1151, %v1385
        %v1536 = vmax.f32 %v1150, %v1387
        %v1537 = vmax.f32 %v1152, %v1389
        %v1538 = vmax.f32 %v1160, %v1391
        %v1539 = vmax.f32 %v1168, %v1393
        %v1540 = vmax.f32 %v1167, %v1395
        %v1541 = vmax.f32 %v1169, %v1397
        %v1542 = vmax.f32 %v1177, %v1399
        %v1543 = vmax.f32 %v1185, %v1401
        %v1544 = vmax.f32 %v1184, %v1403
        %v1545 = vmax.f32 %v1186, %v1405
        %v1546 = vmax.f32 %v1194, %v1407
        %v1547 = vmax.f32 %v1202, %v1409
        %v1548 = vmax.f32 %v1201, %v1411
        %v1549 = vmax.f32 %v1203, %v1413
        %v1550 = vmax.f32 %v1211, %v1415
        %v1551 = vmax.f32 %v1219, %v1417
        %v1552 = vmax.f32 %v1218, %v1419
        %v1553 = vmax.f32 %v1220, %v1421
        %v1554 = vmax.f32 %v1228, %v1423
        %v1555 = vmax.f32 %v1236, %v1425
        %v1556 = vmax.f32 %v1235, %v1427
        %v1557 = vmax.f32 %v1237, %v1429
        %v1558 = vmax.f32 %v1495, %v1303
        %v1559 = vmax.f32 %v1496, %v1305
        %v1560 = vmax.f32 %v1497, %v1307
        %v1561 = vmax.f32 %v1498, %v1309
        %v1562 = vmax.f32 %v1499, %v1311
        %v1563 = vmax.f32 %v1500, %v1313
        %v1564 = vmax.f32 %v1501, %v1315
        %v1565 = vmax.f32 %v1503, %v1319
        %v1566 = vmax.f32 %v1504, %v1321
        %v1567 = vmax.f32 %v1505, %v1323
        %v1568 = vmax.f32 %v1506, %v1325
        %v1569 = vmax.f32 %v1507, %v1327
        %v1570 = vmax.f32 %v1508, %v1329
        %v1571 = vmax.f32 %v1509, %v1331
        %v1572 = vmax.f32 %v1511, %v1335
        %v1573 = vmax.f32 %v1512, %v1337
        %v1574 = vmax.f32 %v1513, %v1339
        %v1575 = vmax.f32 %v1514, %v1341
        %v1576 = vmax.f32 %v1515, %v1343
        %v1577 = vmax.f32 %v1516, %v1345
        %v1578 = vmax.f32 %v1517, %v1347
        %v1579 = vmax.f32 %v1519, %v1351
        %v1580 = vmax.f32 %v1520, %v1353
        %v1581 = vmax.f32 %v1521, %v1355
        %v1582 = vmax.f32 %v1522, %v1357
        %v1583 = vmax.f32 %v1523, %v1359
        %v1584 = vmax.f32 %v1524, %v1361
        %v1585 = vmax.f32 %v1525, %v1363
        %v1586 = vmax.f32 %v1527, %v1367
        %v1587 = vmax.f32 %v1528, %v1369
        %v1588 = vmax.f32 %v1529, %v1371
        %v1589 = vmax.f32 %v1530, %v1373
        %v1590 = vmax.f32 %v1531, %v1375
        %v1591 = vmax.f32 %v1532, %v1377
        %v1592 = vmax.f32 %v1533, %v1379
        %v1593 = vmax.f32 %v1535, %v1383
        %v1594 = vmax.f32 %v1536, %v1385
        %v1595 = vmax.f32 %v1537, %v1387
        %v1596 = vmax.f32 %v1538, %v1389
        %v1597 = vmax.f32 %v1539, %v1391
        %v1598 = vmax.f32 %v1540, %v1393
        %v1599 = vmax.f32 %v1541, %v1395
        %v1600 = vmax.f32 %v1543, %v1399
        %v1601 = vmax.f32 %v1544, %v1401
        %v1602 = vmax.f32 %v1545, %v1403
        %v1603 = vmax.f32 %v1546, %v1405
        %v1604 = vmax.f32 %v1547, %v1407
        %v1605 = vmax.f32 %v1548, %v1409
        %v1606 = vmax.f32 %v1549, %v1411
        %v1607 = vmax.f32 %v1551, %v1415
        %v1608 = vmax.f32 %v1552, %v1417
        %v1609 = vmax.f32 %v1553, %v1419
        %v1610 = vmax.f32 %v1554, %v1421
        %v1611 = vmax.f32 %v1555, %v1423
        %v1612 = vmax.f32 %v1556, %v1425
        %v1613 = vmax.f32 %v1557, %v1427
        %v1670 = vlaneseq
        %v1671 = vshrl.u32 %v1670, 7
        %v1672 = vsub.s32 0, %v1671
        %v1673 = vrot.slane %v1558, %v1672
        %v1674 = vlaneseq
        %v1675 = vshrl.u32 %v1674, 7
        %v1676 = vsub.s32 0, %v1675
        %v1677 = vrot.slane %v1559, %v1676
        %v1678 = vlaneseq
        %v1679 = vshrl.u32 %v1678, 7
        %v1680 = vsub.s32 0, %v1679
        %v1681 = vrot.slane %v1560, %v1680
        %v1682 = vlaneseq
        %v1683 = vshrl.u32 %v1682, 7
        %v1684 = vsub.s32 0, %v1683
        %v1685 = vrot.slane %v1561, %v1684
        %v1686 = vlaneseq
        %v1687 = vshrl.u32 %v1686, 7
        %v1688 = vsub.s32 0, %v1687
        %v1689 = vrot.slane %v1562, %v1688
        %v1690 = vlaneseq
        %v1691 = vshrl.u32 %v1690, 7
        %v1692 = vsub.s32 0, %v1691
        %v1693 = vrot.slane %v1563, %v1692
        %v1694 = vlaneseq
        %v1695 = vshrl.u32 %v1694, 7
        %v1696 = vsub.s32 0, %v1695
        %v1697 = vrot.slane %v1564, %v1696
        %v1698 = vlaneseq
        %v1699 = vshrl.u32 %v1698, 7
        %v1700 = vsub.s32 0, %v1699
        %v1701 = vrot.slane %v1565, %v1700
        %v1702 = vlaneseq
        %v1703 = vshrl.u32 %v1702, 7
        %v1704 = vsub.s32 0, %v1703
        %v1705 = vrot.slane %v1566, %v1704
        %v1706 = vlaneseq
        %v1707 = vshrl.u32 %v1706, 7
        %v1708 = vsub.s32 0, %v1707
        %v1709 = vrot.slane %v1567, %v1708
        %v1710 = vlaneseq
        %v1711 = vshrl.u32 %v1710, 7
        %v1712 = vsub.s32 0, %v1711
        %v1713 = vrot.slane %v1568, %v1712
        %v1714 = vlaneseq
        %v1715 = vshrl.u32 %v1714, 7
        %v1716 = vsub.s32 0, %v1715
        %v1717 = vrot.slane %v1569, %v1716
        %v1718 = vlaneseq
        %v1719 = vshrl.u32 %v1718, 7
        %v1720 = vsub.s32 0, %v1719
        %v1721 = vrot.slane %v1570, %v1720
        %v1722 = vlaneseq
        %v1723 = vshrl.u32 %v1722, 7
        %v1724 = vsub.s32 0, %v1723
        %v1725 = vrot.slane %v1571, %v1724
        %v1726 = vlaneseq
        %v1727 = vshrl.u32 %v1726, 7
        %v1728 = vsub.s32 0, %v1727
        %v1729 = vrot.slane %v1572, %v1728
        %v1730 = vlaneseq
        %v1731 = vshrl.u32 %v1730, 7
        %v1732 = vsub.s32 0, %v1731
        %v1733 = vrot.slane %v1573, %v1732
        %v1734 = vlaneseq
        %v1735 = vshrl.u32 %v1734, 7
        %v1736 = vsub.s32 0, %v1735
        %v1737 = vrot.slane %v1574, %v1736
        %v1738 = vlaneseq
        %v1739 = vshrl.u32 %v1738, 7
        %v1740 = vsub.s32 0, %v1739
        %v1741 = vrot.slane %v1575, %v1740
        %v1742 = vlaneseq
        %v1743 = vshrl.u32 %v1742, 7
        %v1744 = vsub.s32 0, %v1743
        %v1745 = vrot.slane %v1576, %v1744
        %v1746 = vlaneseq
        %v1747 = vshrl.u32 %v1746, 7
        %v1748 = vsub.s32 0, %v1747
        %v1749 = vrot.slane %v1577, %v1748
        %v1750 = vlaneseq
        %v1751 = vshrl.u32 %v1750, 7
        %v1752 = vsub.s32 0, %v1751
        %v1753 = vrot.slane %v1578, %v1752
        %v1754 = vlaneseq
        %v1755 = vshrl.u32 %v1754, 7
        %v1756 = vsub.s32 0, %v1755
        %v1757 = vrot.slane %v1579, %v1756
        %v1758 = vlaneseq
        %v1759 = vshrl.u32 %v1758, 7
        %v1760 = vsub.s32 0, %v1759
        %v1761 = vrot.slane %v1580, %v1760
        %v1762 = vlaneseq
        %v1763 = vshrl.u32 %v1762, 7
        %v1764 = vsub.s32 0, %v1763
        %v1765 = vrot.slane %v1581, %v1764
        %v1766 = vlaneseq
        %v1767 = vshrl.u32 %v1766, 7
        %v1768 = vsub.s32 0, %v1767
        %v1769 = vrot.slane %v1582, %v1768
        %v1770 = vlaneseq
        %v1771 = vshrl.u32 %v1770, 7
        %v1772 = vsub.s32 0, %v1771
        %v1773 = vrot.slane %v1583, %v1772
        %v1774 = vlaneseq
        %v1775 = vshrl.u32 %v1774, 7
        %v1776 = vsub.s32 0, %v1775
        %v1777 = vrot.slane %v1584, %v1776
        %v1778 = vlaneseq
        %v1779 = vshrl.u32 %v1778, 7
        %v1780 = vsub.s32 0, %v1779
        %v1781 = vrot.slane %v1585, %v1780
        %v1782 = vlaneseq
        %v1783 = vshrl.u32 %v1782, 7
        %v1784 = vsub.s32 0, %v1783
        %v1785 = vrot.slane %v1586, %v1784
        %v1786 = vlaneseq
        %v1787 = vshrl.u32 %v1786, 7
        %v1788 = vsub.s32 0, %v1787
        %v1789 = vrot.slane %v1587, %v1788
        %v1790 = vlaneseq
        %v1791 = vshrl.u32 %v1790, 7
        %v1792 = vsub.s32 0, %v1791
        %v1793 = vrot.slane %v1588, %v1792
        %v1794 = vlaneseq
        %v1795 = vshrl.u32 %v1794, 7
        %v1796 = vsub.s32 0, %v1795
        %v1797 = vrot.slane %v1589, %v1796
        %v1798 = vlaneseq
        %v1799 = vshrl.u32 %v1798, 7
        %v1800 = vsub.s32 0, %v1799
        %v1801 = vrot.slane %v1590, %v1800
        %v1802 = vlaneseq
        %v1803 = vshrl.u32 %v1802, 7
        %v1804 = vsub.s32 0, %v1803
        %v1805 = vrot.slane %v1591, %v1804
        %v1806 = vlaneseq
        %v1807 = vshrl.u32 %v1806, 7
        %v1808 = vsub.s32 0, %v1807
        %v1809 = vrot.slane %v1592, %v1808
        %v1810 = vlaneseq
        %v1811 = vshrl.u32 %v1810, 7
        %v1812 = vsub.s32 0, %v1811
        %v1813 = vrot.slane %v1593, %v1812
        %v1814 = vlaneseq
        %v1815 = vshrl.u32 %v1814, 7
        %v1816 = vsub.s32 0, %v1815
        %v1817 = vrot.slane %v1594, %v1816
        %v1818 = vlaneseq
        %v1819 = vshrl.u32 %v1818, 7
        %v1820 = vsub.s32 0, %v1819
        %v1821 = vrot.slane %v1595, %v1820
        %v1822 = vlaneseq
        %v1823 = vshrl.u32 %v1822, 7
        %v1824 = vsub.s32 0, %v1823
        %v1825 = vrot.slane %v1596, %v1824
        %v1826 = vlaneseq
        %v1827 = vshrl.u32 %v1826, 7
        %v1828 = vsub.s32 0, %v1827
        %v1829 = vrot.slane %v1597, %v1828
        %v1830 = vlaneseq
        %v1831 = vshrl.u32 %v1830, 7
        %v1832 = vsub.s32 0, %v1831
        %v1833 = vrot.slane %v1598, %v1832
        %v1834 = vlaneseq
        %v1835 = vshrl.u32 %v1834, 7
        %v1836 = vsub.s32 0, %v1835
        %v1837 = vrot.slane %v1599, %v1836
        %v1838 = vlaneseq
        %v1839 = vshrl.u32 %v1838, 7
        %v1840 = vsub.s32 0, %v1839
        %v1841 = vrot.slane %v1600, %v1840
        %v1842 = vlaneseq
        %v1843 = vshrl.u32 %v1842, 7
        %v1844 = vsub.s32 0, %v1843
        %v1845 = vrot.slane %v1601, %v1844
        %v1846 = vlaneseq
        %v1847 = vshrl.u32 %v1846, 7
        %v1848 = vsub.s32 0, %v1847
        %v1849 = vrot.slane %v1602, %v1848
        %v1850 = vlaneseq
        %v1851 = vshrl.u32 %v1850, 7
        %v1852 = vsub.s32 0, %v1851
        %v1853 = vrot.slane %v1603, %v1852
        %v1854 = vlaneseq
        %v1855 = vshrl.u32 %v1854, 7
        %v1856 = vsub.s32 0, %v1855
        %v1857 = vrot.slane %v1604, %v1856
        %v1858 = vlaneseq
        %v1859 = vshrl.u32 %v1858, 7
        %v1860 = vsub.s32 0, %v1859
        %v1861 = vrot.slane %v1605, %v1860
        %v1862 = vlaneseq
        %v1863 = vshrl.u32 %v1862, 7
        %v1864 = vsub.s32 0, %v1863
        %v1865 = vrot.slane %v1606, %v1864
        %v1866 = vlaneseq
        %v1867 = vshrl.u32 %v1866, 7
        %v1868 = vsub.s32 0, %v1867
        %v1869 = vrot.slane %v1607, %v1868
        %v1870 = vlaneseq
        %v1871 = vshrl.u32 %v1870, 7
        %v1872 = vsub.s32 0, %v1871
        %v1873 = vrot.slane %v1608, %v1872
        %v1874 = vlaneseq
        %v1875 = vshrl.u32 %v1874, 7
        %v1876 = vsub.s32 0, %v1875
        %v1877 = vrot.slane %v1609, %v1876
        %v1878 = vlaneseq
        %v1879 = vshrl.u32 %v1878, 7
        %v1880 = vsub.s32 0, %v1879
        %v1881 = vrot.slane %v1610, %v1880
        %v1882 = vlaneseq
        %v1883 = vshrl.u32 %v1882, 7
        %v1884 = vsub.s32 0, %v1883
        %v1885 = vrot.slane %v1611, %v1884
        %v1886 = vlaneseq
        %v1887 = vshrl.u32 %v1886, 7
        %v1888 = vsub.s32 0, %v1887
        %v1889 = vrot.slane %v1612, %v1888
        %v1890 = vlaneseq
        %v1891 = vshrl.u32 %v1890, 7
        %v1892 = vsub.s32 0, %v1891
        %v1893 = vrot.slane %v1613, %v1892
        %vm1894 = vcmask 1042434
        %v1895 = vsel %vm1894, %v1677, %v1673
        %vm1896 = vcmask 1043459
        %v1897 = vsel %vm1896, %v1681, %v1895
        %vm1898 = vcmask 1044484
        %v1899 = vsel %vm1898, %v1685, %v1897
        %vm1900 = vcmask 1045509
        %v1901 = vsel %vm1900, %v1689, %v1899
        %vm1902 = vcmask 1046534
        %v1903 = vsel %vm1902, %v1693, %v1901
        %vm1904 = vcmask 1047559
        %v1905 = vsel %vm1904, %v1697, %v1903
        %v1906 = vsel %vm1894, %v1705, %v1701
        %v1907 = vsel %vm1896, %v1709, %v1906
        %v1908 = vsel %vm1898, %v1713, %v1907
        %v1909 = vsel %vm1900, %v1717, %v1908
        %v1910 = vsel %vm1902, %v1721, %v1909
        %v1911 = vsel %vm1904, %v1725, %v1910
        %v1912 = vsel %vm1894, %v1733, %v1729
        %v1913 = vsel %vm1896, %v1737, %v1912
        %v1914 = vsel %vm1898, %v1741, %v1913
        %v1915 = vsel %vm1900, %v1745, %v1914
        %v1916 = vsel %vm1902, %v1749, %v1915
        %v1917 = vsel %vm1904, %v1753, %v1916
        %v1918 = vsel %vm1894, %v1761, %v1757
        %v1919 = vsel %vm1896, %v1765, %v1918
        %v1920 = vsel %vm1898, %v1769, %v1919
        %v1921 = vsel %vm1900, %v1773, %v1920
        %v1922 = vsel %vm1902, %v1777, %v1921
        %v1923 = vsel %vm1904, %v1781, %v1922
        %v1924 = vsel %vm1894, %v1789, %v1785
        %v1925 = vsel %vm1896, %v1793, %v1924
        %v1926 = vsel %vm1898, %v1797, %v1925
        %v1927 = vsel %vm1900, %v1801, %v1926
        %v1928 = vsel %vm1902, %v1805, %v1927
        %v1929 = vsel %vm1904, %v1809, %v1928
        %v1930 = vsel %vm1894, %v1817, %v1813
        %v1931 = vsel %vm1896, %v1821, %v1930
        %v1932 = vsel %vm1898, %v1825, %v1931
        %v1933 = vsel %vm1900, %v1829, %v1932
        %v1934 = vsel %vm1902, %v1833, %v1933
        %v1935 = vsel %vm1904, %v1837, %v1934
        %v1936 = vsel %vm1894, %v1845, %v1841
        %v1937 = vsel %vm1896, %v1849, %v1936
        %v1938 = vsel %vm1898, %v1853, %v1937
        %v1939 = vsel %vm1900, %v1857, %v1938
        %v1940 = vsel %vm1902, %v1861, %v1939
        %v1941 = vsel %vm1904, %v1865, %v1940
        %v1942 = vsel %vm1894, %v1873, %v1869
        %v1943 = vsel %vm1896, %v1877, %v1942
        %v1944 = vsel %vm1898, %v1881, %v1943
        %v1945 = vsel %vm1900, %v1885, %v1944
        %v1946 = vsel %vm1902, %v1889, %v1945
        %v1947 = vsel %vm1904, %v1893, %v1946
        %vm1956 = vcmask 1040384
        %v1957 = vsel %vm1956, %v1494, %v1905
        %v1958 = vsel %vm1956, %v1502, %v1911
        %v1959 = vsel %vm1956, %v1510, %v1917
        %v1960 = vsel %vm1956, %v1518, %v1923
        %v1961 = vsel %vm1956, %v1526, %v1929
        %v1962 = vsel %vm1956, %v1534, %v1935
        %v1963 = vsel %vm1956, %v1542, %v1941
        %v1964 = vsel %vm1956, %v1550, %v1947
        %vm1965 = vcmask 523264
        %v1966 = vsel %vm1965, %v1957, 0.0
        %v1967 = vsel %vm1965, %v1958, 0.0
        %v1968 = vadd.f32 %v1966, %v1967
        %v1969 = vsel %vm1965, %v1959, 0.0
        %v1970 = vadd.f32 %v1968, %v1969
        %v1971 = vsel %vm1965, %v1960, 0.0
        %v1972 = vadd.f32 %v1970, %v1971
        %v1973 = vsel %vm1965, %v1961, 0.0
        %v1974 = vadd.f32 %v1972, %v1973
        %v1975 = vsel %vm1965, %v1962, 0.0
        %v1976 = vadd.f32 %v1974, %v1975
        %v1977 = vsel %vm1965, %v1963, 0.0
        %v1978 = vadd.f32 %v1976, %v1977
        %v1979 = vsel %vm1965, %v1964, 0.0
        %v1980 = vadd.f32 %v1978, %v1979
        %v1981 = vrot.slane %v1980, 4
        %v1982 = vadd.f32 %v1980, %v1981
        %v1983 = vrot.slane %v1982, 2
        %v1984 = vadd.f32 %v1982, %v1983
        %v1985 = vrot.slane %v1984, 1
        %v1986 = vadd.f32 %v1984, %v1985
        %v1987 = vmul.f32 %v1986, 0.015625
        %v1988 = vpack.c.bf16 %v1987, %v1987
        %v1989 = vld [vmem:[%s4] sm:$0xf]
        %v1990 = vld [vmem:[%s4 + $0x4] sm:$0xf]
        %v1991 = vld [vmem:[%s4 + $0x8] sm:$0xf]
        %v1992 = vld [vmem:[%s4 + $0xc] sm:$0xf]
        %v1993 = vld [vmem:[%s4 + $0x10] sm:$0xf]
        %v1994 = vld [vmem:[%s4 + $0x14] sm:$0xf]
        %v1995 = vld [vmem:[%s4 + $0x18] sm:$0xf]
        %v1996 = vld [vmem:[%s4 + $0x1c] sm:$0xf]
        %v1997 = vld [vmem:[%s5] sm:$0x1]
        %v2006 = vunpack.c.l.b16 %v1989
        %v2007 = vunpack.c.l.b16 %v1990
        %v2008 = vunpack.c.l.b16 %v1991
        %v2009 = vunpack.c.l.b16 %v1992
        %v2010 = vunpack.c.l.b16 %v1993
        %v2011 = vunpack.c.l.b16 %v1994
        %v2012 = vunpack.c.l.b16 %v1995
        %v2013 = vunpack.c.l.b16 %v1996
        %v2014 = vpack.c.b16 %v2007, %v2006
        %v2015 = vpack.c.b16 %v2009, %v2008
        %v2016 = vpack.c.b16 %v2011, %v2010
        %v2017 = vpack.c.b16 %v2013, %v2012
        %v2023 = vsel %vm1965, %v1988, 0
        %2025 = vmatprep.subr.bf16.mxu0 0
        %2026 = vmatpush1.bf16.msra.mxu0 0
        %2027 = vmatprep.subr.bf16.mxu0 0
        %2028 = vmatpush1.bf16.msra.mxu0 0
        %2029 = vmatprep.subr.bf16.mxu0 0
        %2030 = vmatpush1.bf16.msra.mxu0 0
        %2031 = vmatprep.subr.bf16.mxu0 0
        %2032 = vmatpush1.bf16.msra.mxu0 0
        %2033 = vmatprep.subr.bf16.mxu0 0
        %2034 = vmatpush1.bf16.msra.mxu0 %v2017
        %2035 = vmatprep.subr.bf16.mxu0 0
        %2036 = vmatpush1.bf16.msra.mxu0 %v2016
        %2037 = vmatprep.subr.bf16.mxu0 0
        %2038 = vmatpush1.bf16.msra.mxu0 %v2015
        %2039 = vmatprep.subr.bf16.mxu0 0
        %2040 = vmatpush1.bf16.msra.mxu0 %v2014
        %2041 = vmatprep.subr.bf16.mxu0 0
        %2042 = vmatpush2.bf16.msra.mxu0 0
        %2043 = vmatprep.subr.bf16.mxu0 0
        %2044 = vmatpush2.bf16.msra.mxu0 0
        %2045 = vmatprep.subr.bf16.mxu0 0
        %2046 = vmatpush2.bf16.msra.mxu0 0
        %2047 = vmatprep.subr.bf16.mxu0 0
        %2048 = vmatpush2.bf16.msra.mxu0 0
        %2049 = vmatprep.subr.bf16.mxu0 0
        %2050 = vmatpush2.bf16.msra.mxu0 0
        %2051 = vmatprep.subr.bf16.mxu0 0
        %2052 = vmatpush2.bf16.msra.mxu0 0
        %2053 = vmatprep.subr.bf16.mxu0 0
        %2054 = vmatpush2.bf16.msra.mxu0 0
        %2055 = vmatprep.subr.bf16.mxu0 0
        %2056 = vmatpush2.bf16.msra.mxu0 0
        %2057 = vmatprep.mubr.bf16.mxu0 0
        %2058 = vmatmul.mubr.bf16.gmra.mxu0 %v2023
        %v2059 = vpop.f32.mrf.mxu0
        %v2060 = vadd.f32 %v1997, %v2059
        %v2061 = vpop.f32.mrf.mxu0
        %v2062 = vpop.f32.mrf.mxu0
        %v2063 = vpop.f32.mrf.mxu0
        %2064 = vdwg.mxu0
        %2065 = vst [vmem:[%s263] sm:$0x1] %v2060
      $region56: #{resnet_ltg_forward.1} parent=43 // pred_fallthru
        _
      %s2066 = smul.u32 %s22, %s21
      %p2067 = scmp.lt.s32.totalorder %s2066, 1
      %s2068 = scalar_select %p2067, %s2066, 1
      %s2069 = scalar_lea.vmem %s6, %s2068
      // Predicated region
      $region57: #{resnet_ltg_forward.1} parent=43 // pred_check
        %p2070 = pneg %p180
      $region58: #{resnet_ltg_forward.1} parent=43 // pred_check_branch
        %2072 = sbr.rel (%p2070) target = $region60
      $region59: #{resnet_ltg_forward.1} parent=43 // pred_region
        %s2073 = smul.u32 %s22, %s21
      $region60: #{resnet_ltg_forward.1} parent=43 // pred_fallthru
        _
    $region44: #{resnet_ltg_forward.1} parent=5 // pred_fallthru
      _
    %p2074 = scmp.le.s32.totalorder 2, %s12
    // Predicated region
    $region61: #{resnet_ltg_forward.1} parent=5 // pred_check
      %p2075 = pneg %p2074
    $region62: #{resnet_ltg_forward.1} parent=5 // pred_check_branch
      %2077 = sbr.rel (%p2075) target = $region64
    $region63: #{resnet_ltg_forward.1} parent=5 // pred_region
      %s2078 = ssub.s32 %s12, 2
      // Predicated region
      $region65: #{resnet_ltg_forward.1} parent=63 // pred_check
        %p2079 = pneg %p186
      $region66: #{resnet_ltg_forward.1} parent=63 // pred_check_branch
        %2081 = sbr.rel (%p2079) target = $region68
      $region67: #{resnet_ltg_forward.1} parent=63 // pred_region
        %s2082 = smul.u32 %s24, %s23
        %p2083 = scmp.lt.s32.totalorder %s2082, 1
        %s2084 = scalar_select %p2083, %s2082, 1
        %s2085 = scalar_lea.vmem %s6, %s2084
      $region68: #{resnet_ltg_forward.1} parent=63 // pred_fallthru
        _
    $region64: #{resnet_ltg_forward.1} parent=5 // pred_fallthru
      _
  $region6: #{resnet_ltg_forward.1} parent=0 // loop_footer
    %s16 = sadd.s32 1, %s12
  $region7: #{resnet_ltg_forward.1} parent=0 // loop_footer_branch
    %11 = sbr.rel target = $region3
  $region8: #{resnet_ltg_forward.1} parent=0 // loop_exit
    _

</llo_original>
